<compile_context>
chip_gen: v6e
topology: v6e:2x2x1
jax: 0.10.0
libtpu: 0.0.40
codegen_flags: <defaults>
</compile_context>

<pallas_src>
import functools
import math

import jax
import jax.numpy as jnp
from jax.experimental import pallas as pl
from jax.experimental.pallas import tpu as pltpu

HIDDEN = 512


def _critic_kernel(x_ref, w1_ref, w2_ref, w3_ref, b_ref, out_ref, *, na2, out_w):
    # x: [TB, obs] f32 -> bf16 for the MXU
    x = x_ref[...].astype(jnp.bfloat16)

    # Layer 1 (both heads fused): [TB, obs] @ [obs, 2H] -> [TB, 2H]
    h1 = jnp.dot(x, w1_ref[...], preferred_element_type=jnp.float32)
    h1 = jnp.maximum(h1 + b_ref[0:1, :], 0.0).astype(jnp.bfloat16)

    # Layer 2: two dots on lane-aligned slices of the fused hidden state.
    h2a = jnp.dot(h1[:, :HIDDEN], w2_ref[0], preferred_element_type=jnp.float32)
    h2b = jnp.dot(h1[:, HIDDEN:], w2_ref[1], preferred_element_type=jnp.float32)
    h2 = jnp.concatenate([h2a, h2b], axis=-1)                 # [TB, 2H]
    h2 = jnp.maximum(h2 + b_ref[1:2, :], 0.0).astype(jnp.bfloat16)

    # Layer 3 (block-diagonal, both heads in one MXU op): [TB, 2H] @ [2H, 2*NA]
    q = jnp.dot(h2, w3_ref[...], preferred_element_type=jnp.float32)
    q = q + b_ref[2:3, :na2]                                  # [TB, 2*NA]

    # Lane-dense output slab [TB, out_w] (single unmasked store).
    if out_w > na2:
        q = jnp.concatenate(
            [q, jnp.zeros((q.shape[0], out_w - na2), jnp.float32)], axis=-1)
    out_ref[...] = q


def pack_params(params):
    """Pack PyTorch-style per-layer params into fused bf16 weights + one bias array."""
    (w1a, b1a), (w2a, b2a), (w3a, b3a) = params["q1"]
    (w1b, b1b), (w2b, b2b), (w3b, b3b) = params["q2"]
    num_actions = w3a.shape[1]

    w1_cat = jnp.concatenate([w1a, w1b], axis=1).astype(jnp.bfloat16)   # [obs, 2H]
    w2_stk = jnp.stack([w2a, w2b], axis=0).astype(jnp.bfloat16)         # [2, H, H]

    z = jnp.zeros((HIDDEN, num_actions), jnp.float32)
    w3_bd = jnp.concatenate(
        [jnp.concatenate([w3a, z], axis=1),
         jnp.concatenate([z, w3b], axis=1)], axis=0).astype(jnp.bfloat16)  # [2H, 2*NA]

    b1_cat = jnp.concatenate([b1a, b1b], axis=1)                          # [1, 2H]
    b2_cat = jnp.concatenate([b2a, b2b], axis=1)                          # [1, 2H]
    b3_cat = jnp.concatenate([b3a, b3b], axis=1)                          # [1, 2*NA]
    b3_row = jnp.pad(b3_cat, ((0, 0), (0, 2 * HIDDEN - 2 * num_actions)))
    b_pack = jnp.concatenate([b1_cat, b2_cat, b3_row], axis=0)            # [3, 2H] f32
    return w1_cat, w2_stk, w3_bd, b_pack, num_actions


def default_critic_forward(state, params):
    """state: [B, obs_size] f32 -> (q1, q2), each [B, num_actions] f32."""
    batch, obs = state.shape
    w1, w2, w3, b_pack, num_actions = pack_params(params)

    na2 = 2 * num_actions
    out_w = pl.cdiv(na2, 128) * 128                 # lane-dense output width (>=128)

    # Pad batch to a multiple of 16 sublanes (bf16 packing) and tile it.
    b_pad0 = pl.cdiv(batch, 16) * 16
    tb = min(256, b_pad0)
    b_pad = pl.cdiv(b_pad0, tb) * tb
    x_pad = jnp.pad(state, ((0, b_pad - batch), (0, 0)))

    kernel = functools.partial(_critic_kernel, na2=na2, out_w=out_w)

    out = pl.pallas_call(
        kernel,
        out_shape=jax.ShapeDtypeStruct((b_pad, out_w), jnp.float32),
        grid=(b_pad // tb,),
        in_specs=[
            pl.BlockSpec((tb, obs), lambda i: (i, 0)),        # activations: tiled over batch
            pl.BlockSpec(w1.shape, lambda i: (0, 0)),         # weights: VMEM-resident
            pl.BlockSpec(w2.shape, lambda i: (0, 0, 0)),
            pl.BlockSpec(w3.shape, lambda i: (0, 0)),
            pl.BlockSpec(b_pack.shape, lambda i: (0, 0)),
        ],
        out_specs=pl.BlockSpec((tb, out_w), lambda i: (i, 0)),
        compiler_params=pltpu.CompilerParams(dimension_semantics=("parallel",)),
    )(x_pad, w1, w2, w3, b_pack)

    q1 = out[:batch, :num_actions]
    q2 = out[:batch, num_actions:na2]
    return q1, q2


# ----------------------------------------------------------------------------
# Parameter init (matches PyTorch nn.Linear defaults) and a pure-JAX reference.
# ----------------------------------------------------------------------------
def init_linear(key, fan_in, fan_out):
    kw, kb = jax.random.split(key)
    bound = 1.0 / math.sqrt(fan_in)
    # Stored as [in, out] (transpose of torch's [out, in]).
    w = jax.random.uniform(kw, (fan_in, fan_out), jnp.float32, -bound, bound)
    b = jax.random.uniform(kb, (1, fan_out), jnp.float32, -bound, bound)
    return w, b


def init_params(key, observation_size, num_actions):
    keys = jax.random.split(key, 6)
    q1 = [
        init_linear(keys[0], observation_size, HIDDEN),
        init_linear(keys[1], HIDDEN, HIDDEN),
        init_linear(keys[2], HIDDEN, num_actions),
    ]
    q2 = [
        init_linear(keys[3], observation_size, HIDDEN),
        init_linear(keys[4], HIDDEN, HIDDEN),
        init_linear(keys[5], HIDDEN, num_actions),
    ]
    return {"q1": q1, "q2": q2}


def reference_forward(state, params):
    def mlp(x, layers):
        (w1, b1), (w2, b2), (w3, b3) = layers
        h = jnp.maximum(x @ w1 + b1, 0.0)
        h = jnp.maximum(h @ w2 + b2, 0.0)
        return h @ w3 + b3
    return mlp(state, params["q1"]), mlp(state, params["q2"])


if __name__ == "__main__":
    observation_size = 16
    num_actions = 8
    batch = 2

    key = jax.random.PRNGKey(0)
    k_state, k_params = jax.random.split(key)

    state = jax.random.normal(k_state, (batch, observation_size), jnp.float32)
    params = init_params(k_params, observation_size, num_actions)

    q1, q2 = jax.jit(default_critic_forward)(state, params)
    jax.block_until_ready((q1, q2))

    # Sanity check against a pure-JAX f32 reference (tolerance loosened for bf16 weights).
    r1, r2 = reference_forward(state, params)
    assert q1.shape == (batch, num_actions) and q2.shape == (batch, num_actions)
    assert jnp.allclose(q1, r1, atol=2e-2, rtol=2e-2)
    assert jnp.allclose(q2, r2, atol=2e-2, rtol=2e-2)

    print("KERNEL_OK")
</pallas_src>

<mosaic_0001>
module attributes {stable_mosaic.version = 11 : i64} {
  func.func @_critic_kernel(%arg0: i32, %arg1: memref<16x16xf32, #tpu.memory_space<vmem>>, %arg2: memref<16x1024xbf16, #tpu.memory_space<vmem>>, %arg3: memref<2x512x512xbf16, #tpu.memory_space<vmem>>, %arg4: memref<1024x16xbf16, #tpu.memory_space<vmem>>, %arg5: memref<3x1024xf32, #tpu.memory_space<vmem>>, %arg6: memref<16x128xf32, #tpu.memory_space<vmem>>) attributes {dimension_semantics = [#tpu.dimension_semantics<parallel>], iteration_bounds = array<i64: 1>, scalar_prefetch = 0 : i64, scratch_operands = 0 : i64, tpu.core_type = #tpu.core_type<tc>, window_params = [{transform_indices = @transform_0, window_bounds = array<i64: 16, 16>}, {pipeline_mode = #tpu.pipeline_mode<synchronous>, transform_indices = @transform_1, window_bounds = array<i64: 16, 1024>}, {pipeline_mode = #tpu.pipeline_mode<synchronous>, transform_indices = @transform_2, window_bounds = array<i64: 2, 512, 512>}, {pipeline_mode = #tpu.pipeline_mode<synchronous>, transform_indices = @transform_3, window_bounds = array<i64: 1024, 16>}, {pipeline_mode = #tpu.pipeline_mode<synchronous>, transform_indices = @transform_4, window_bounds = array<i64: 3, 1024>}, {transform_indices = @transform_5, window_bounds = array<i64: 16, 128>}]} {
    %c0 = arith.constant 0 : index
    %c0_0 = arith.constant 0 : index
    %0 = vector.load %arg1[%c0, %c0_0] : memref<16x16xf32, #tpu.memory_space<vmem>>, vector<16x16xf32>
    %1 = arith.truncf %0 : vector<16x16xf32> to vector<16x16xbf16>
    %c0_1 = arith.constant 0 : index
    %c0_2 = arith.constant 0 : index
    %2 = vector.load %arg2[%c0_1, %c0_2] : memref<16x1024xbf16, #tpu.memory_space<vmem>>, vector<16x1024xbf16>
    %cst = arith.constant dense<0.000000e+00> : vector<16x1024xf32>
    %3 = tpu.matmul %1, %2, %cst {dimension_numbers = #tpu.dot_dimension_numbers<[1], [0], [0], [1], [0, 0, 1, 1], [], []>} : vector<16x16xbf16>, vector<16x1024xbf16>, vector<16x1024xf32> -> vector<16x1024xf32>
    %c0_3 = arith.constant 0 : index
    %c0_4 = arith.constant 0 : index
    %4 = vector.load %arg5[%c0_3, %c0_4] : memref<3x1024xf32, #tpu.memory_space<vmem>>, vector<1x1024xf32>
    %5 = vector.broadcast %4 : vector<1x1024xf32> to vector<16x1024xf32>
    %6 = arith.addf %3, %5 : vector<16x1024xf32>
    %cst_5 = arith.constant 0.000000e+00 : f32
    %7 = vector.broadcast %cst_5 : f32 to vector<16x1024xf32>
    %8 = arith.maximumf %6, %7 : vector<16x1024xf32>
    %9 = arith.truncf %8 : vector<16x1024xf32> to vector<16x1024xbf16>
    %10 = vector.extract_strided_slice %9 {offsets = [0, 0], sizes = [16, 512], strides = [1, 1]} : vector<16x1024xbf16> to vector<16x512xbf16>
    %c0_6 = arith.constant 0 : index
    %c0_7 = arith.constant 0 : index
    %c0_8 = arith.constant 0 : index
    %11 = vector.load %arg3[%c0_6, %c0_7, %c0_8] : memref<2x512x512xbf16, #tpu.memory_space<vmem>>, vector<1x512x512xbf16>
    %12 = vector.shape_cast %11 : vector<1x512x512xbf16> to vector<512x512xbf16>
    %cst_9 = arith.constant dense<0.000000e+00> : vector<16x512xf32>
    %13 = tpu.matmul %10, %12, %cst_9 {dimension_numbers = #tpu.dot_dimension_numbers<[1], [0], [0], [1], [0, 0, 1, 1], [], []>} : vector<16x512xbf16>, vector<512x512xbf16>, vector<16x512xf32> -> vector<16x512xf32>
    %14 = vector.extract_strided_slice %9 {offsets = [0, 512], sizes = [16, 512], strides = [1, 1]} : vector<16x1024xbf16> to vector<16x512xbf16>
    %c1 = arith.constant 1 : index
    %c0_10 = arith.constant 0 : index
    %c0_11 = arith.constant 0 : index
    %15 = vector.load %arg3[%c1, %c0_10, %c0_11] : memref<2x512x512xbf16, #tpu.memory_space<vmem>>, vector<1x512x512xbf16>
    %16 = vector.shape_cast %15 : vector<1x512x512xbf16> to vector<512x512xbf16>
    %cst_12 = arith.constant dense<0.000000e+00> : vector<16x512xf32>
    %17 = tpu.matmul %14, %16, %cst_12 {dimension_numbers = #tpu.dot_dimension_numbers<[1], [0], [0], [1], [0, 0, 1, 1], [], []>} : vector<16x512xbf16>, vector<512x512xbf16>, vector<16x512xf32> -> vector<16x512xf32>
    %18 = tpu.concatenate %13, %17 in 1 : vector<16x512xf32>, vector<16x512xf32> -> vector<16x1024xf32>
    %c1_13 = arith.constant 1 : index
    %c0_14 = arith.constant 0 : index
    %19 = vector.load %arg5[%c1_13, %c0_14] : memref<3x1024xf32, #tpu.memory_space<vmem>>, vector<1x1024xf32>
    %20 = vector.broadcast %19 : vector<1x1024xf32> to vector<16x1024xf32>
    %21 = arith.addf %18, %20 : vector<16x1024xf32>
    %cst_15 = arith.constant 0.000000e+00 : f32
    %22 = vector.broadcast %cst_15 : f32 to vector<16x1024xf32>
    %23 = arith.maximumf %21, %22 : vector<16x1024xf32>
    %24 = arith.truncf %23 : vector<16x1024xf32> to vector<16x1024xbf16>
    %c0_16 = arith.constant 0 : index
    %c0_17 = arith.constant 0 : index
    %25 = vector.load %arg4[%c0_16, %c0_17] : memref<1024x16xbf16, #tpu.memory_space<vmem>>, vector<1024x16xbf16>
    %cst_18 = arith.constant dense<0.000000e+00> : vector<16x16xf32>
    %26 = tpu.matmul %24, %25, %cst_18 {dimension_numbers = #tpu.dot_dimension_numbers<[1], [0], [0], [1], [0, 0, 1, 1], [], []>} : vector<16x1024xbf16>, vector<1024x16xbf16>, vector<16x16xf32> -> vector<16x16xf32>
    %c2 = arith.constant 2 : index
    %c0_19 = arith.constant 0 : index
    %27 = vector.load %arg5[%c2, %c0_19] : memref<3x1024xf32, #tpu.memory_space<vmem>>, vector<1x16xf32>
    %28 = vector.broadcast %27 : vector<1x16xf32> to vector<16x16xf32>
    %29 = arith.addf %26, %28 : vector<16x16xf32>
    %cst_20 = arith.constant 0.000000e+00 : f32
    %30 = vector.broadcast %cst_20 : f32 to vector<16x112xf32>
    %31 = tpu.concatenate %29, %30 in 1 : vector<16x16xf32>, vector<16x112xf32> -> vector<16x128xf32>
    %c0_21 = arith.constant 0 : index
    %c0_22 = arith.constant 0 : index
    %32 = vector.load %arg6[%c0_21, %c0_22] : memref<16x128xf32, #tpu.memory_space<vmem>>, vector<16x128xf32>
    tpu.vector_store %arg6[%c0_21, %c0_22], %31 {strides = array<i32>} : memref<16x128xf32, #tpu.memory_space<vmem>>, vector<16x128xf32>,
    return
  }
  func.func @transform_0(%arg0: i32) -> (i32, i32) {
    %c0_i32 = arith.constant 0 : i32
    %c0_i32_0 = arith.constant 0 : i32
    return %arg0, %c0_i32 : i32, i32
  }
  func.func @transform_1(%arg0: i32) -> (i32, i32) {
    %c0_i32 = arith.constant 0 : i32
    %c0_i32_0 = arith.constant 0 : i32
    %c0_i32_1 = arith.constant 0 : i32
    return %c0_i32, %c0_i32_0 : i32, i32
  }
  func.func @transform_2(%arg0: i32) -> (i32, i32, i32) {
    %c0_i32 = arith.constant 0 : i32
    %c0_i32_0 = arith.constant 0 : i32
    %c0_i32_1 = arith.constant 0 : i32
    %c0_i32_2 = arith.constant 0 : i32
    return %c0_i32, %c0_i32_0, %c0_i32_1 : i32, i32, i32
  }
  func.func @transform_3(%arg0: i32) -> (i32, i32) {
    %c0_i32 = arith.constant 0 : i32
    %c0_i32_0 = arith.constant 0 : i32
    %c0_i32_1 = arith.constant 0 : i32
    return %c0_i32, %c0_i32_0 : i32, i32
  }
  func.func @transform_4(%arg0: i32) -> (i32, i32) {
    %c0_i32 = arith.constant 0 : i32
    %c0_i32_0 = arith.constant 0 : i32
    %c0_i32_1 = arith.constant 0 : i32
    return %c0_i32, %c0_i32_0 : i32, i32
  }
  func.func @transform_5(%arg0: i32) -> (i32, i32) {
    %c0_i32 = arith.constant 0 : i32
    %c0_i32_0 = arith.constant 0 : i32
    return %arg0, %c0_i32 : i32, i32
  }
}

</mosaic_0001>

<llo_original>
// kernel: default_critic_forward.1
$region0: #{default_critic_forward.1}
  #allocation0 [shape = 'u32[]', space=smem, size = 0x4, offset = 0x4, fixed_abs, tag = 'smem constant byte address 0x4 - core index']
  #allocation1 [shape = 'u32[144,128]{1,0:T(1,128)}', space=vmem, size = 0x12000, scoped, tag = 'internal scratch']
  %s0 = inlined_call_operand.vmem [shape: f32[16,16], index: 0, kind: input, shape index: {}]
  %s1 = inlined_call_operand.vmem [shape: bf16[16,1024], index: 1, kind: input, shape index: {}]
  %s2 = inlined_call_operand.vmem [shape: bf16[2,512,512], index: 2, kind: input, shape index: {}]
  %s3 = inlined_call_operand.vmem [shape: bf16[1024,16], index: 3, kind: input, shape index: {}]
  %s4 = inlined_call_operand.vmem [shape: f32[3,1024], index: 4, kind: input, shape index: {}]
  %s5 = inlined_call_operand.vmem [shape: f32[16,128], index: 5, kind: output, shape index: {}]
  %s6 = sld [smem:[#allocation0]]
  $region30: #{default_critic_forward.1} parent=0
    _
  %s8 = ssub.s32 1, %s6
  %s9 = scalar_select 0, %s8, %s6
  // Predicated region
  $region2: #{default_critic_forward.1} parent=0 // pred_check
    _
  $region3: #{default_critic_forward.1} parent=0 // pred_check_branch
    %11 = sbr.rel (0) target = $region5
  $region4: #{default_critic_forward.1} parent=0 // pred_region
    _
  $region5: #{default_critic_forward.1} parent=0 // pred_fallthru
    _
  // Predicated region
  $region6: #{default_critic_forward.1} parent=0 // pred_check
    _
  $region7: #{default_critic_forward.1} parent=0 // pred_check_branch
    %13 = sbr.rel (0) target = $region9
  $region8: #{default_critic_forward.1} parent=0 // pred_region
    _
  $region9: #{default_critic_forward.1} parent=0 // pred_fallthru
    _
  // Predicated region
  $region10: #{default_critic_forward.1} parent=0 // pred_check
    _
  $region11: #{default_critic_forward.1} parent=0 // pred_check_branch
    %15 = sbr.rel (0) target = $region13
  $region12: #{default_critic_forward.1} parent=0 // pred_region
    _
  $region13: #{default_critic_forward.1} parent=0 // pred_fallthru
    _
  // Predicated region
  $region14: #{default_critic_forward.1} parent=0 // pred_check
    _
  $region15: #{default_critic_forward.1} parent=0 // pred_check_branch
    %17 = sbr.rel (0) target = $region17
  $region16: #{default_critic_forward.1} parent=0 // pred_region
    _
  $region17: #{default_critic_forward.1} parent=0 // pred_fallthru
    _
  // Predicated region
  $region18: #{default_critic_forward.1} parent=0 // pred_check
    _
  $region19: #{default_critic_forward.1} parent=0 // pred_check_branch
    %19 = sbr.rel (0) target = $region21
  $region20: #{default_critic_forward.1} parent=0 // pred_region
    _
  $region21: #{default_critic_forward.1} parent=0 // pred_fallthru
    _
  %v21 = vld [vmem:[%s0] sm:$0xff]
  %v22 = vld [vmem:[%s0 + $0x8] sm:$0xff]
  %v23 = vpack.c.bf16 %v22, %v21
  %v24 = vld [vmem:[%s1] sm:$0xff]
  %v25 = vld [vmem:[%s1 + $0x8] sm:$0xff]
  %v26 = vld [vmem:[%s1 + $0x10] sm:$0xff]
  %v27 = vld [vmem:[%s1 + $0x18] sm:$0xff]
  %v28 = vld [vmem:[%s1 + $0x20] sm:$0xff]
  %v29 = vld [vmem:[%s1 + $0x28] sm:$0xff]
  %v30 = vld [vmem:[%s1 + $0x30] sm:$0xff]
  %v31 = vld [vmem:[%s1 + $0x38] sm:$0xff]
  %v32 = vld [vmem:[%s4] ss:$4 sm:$0xff]
  %v34 = vlaneseq
  %v35 = vshrl.u32 %v34, 7
  %v36 = vsub.s32 0, %v35
  %v37 = vrot.slane %v32, %v36
  %v38 = vlaneseq
  %v39 = vshrl.u32 %v38, 7
  %v40 = vsub.s32 1, %v39
  %v41 = vrot.slane %v32, %v40
  %v42 = vlaneseq
  %v43 = vshrl.u32 %v42, 7
  %v44 = vsub.s32 2, %v43
  %v45 = vrot.slane %v32, %v44
  %v46 = vlaneseq
  %v47 = vshrl.u32 %v46, 7
  %v48 = vsub.s32 3, %v47
  %v49 = vrot.slane %v32, %v48
  %v50 = vlaneseq
  %v51 = vshrl.u32 %v50, 7
  %v52 = vsub.s32 4, %v51
  %v53 = vrot.slane %v32, %v52
  %v54 = vlaneseq
  %v55 = vshrl.u32 %v54, 7
  %v56 = vsub.s32 5, %v55
  %v57 = vrot.slane %v32, %v56
  %v58 = vlaneseq
  %v59 = vshrl.u32 %v58, 7
  %v60 = vsub.s32 6, %v59
  %v61 = vrot.slane %v32, %v60
  %v62 = vlaneseq
  %v63 = vshrl.u32 %v62, 7
  %v64 = vsub.s32 7, %v63
  %v65 = vrot.slane %v32, %v64
  %v82 = vunpack.c.l.b16 %v24
  %v83 = vunpack.c.h.b16 %v24
  %v84 = vunpack.c.l.b16 %v25
  %v85 = vunpack.c.h.b16 %v25
  %v86 = vunpack.c.l.b16 %v26
  %v87 = vunpack.c.h.b16 %v26
  %v88 = vunpack.c.l.b16 %v27
  %v89 = vunpack.c.h.b16 %v27
  %v90 = vunpack.c.l.b16 %v28
  %v91 = vunpack.c.h.b16 %v28
  %v92 = vunpack.c.l.b16 %v29
  %v93 = vunpack.c.h.b16 %v29
  %v94 = vunpack.c.l.b16 %v30
  %v95 = vunpack.c.h.b16 %v30
  %v96 = vunpack.c.l.b16 %v31
  %v97 = vunpack.c.h.b16 %v31
  %v98 = vpack.c.b16 %v90, %v82
  %v99 = vpack.c.b16 %v91, %v83
  %v100 = vpack.c.b16 %v92, %v84
  %v101 = vpack.c.b16 %v93, %v85
  %v102 = vpack.c.b16 %v94, %v86
  %v103 = vpack.c.b16 %v95, %v87
  %v104 = vpack.c.b16 %v96, %v88
  %v105 = vpack.c.b16 %v97, %v89
  %vm114 = vcmask 130048
  %v116 = vsel %vm114, %v23, 0
  %118 = vmatprep.subr.bf16.mxu0 0
  %119 = vmatpush1.bf16.msra.mxu0 0
  %120 = vmatprep.subr.bf16.mxu0 0
  %121 = vmatpush1.bf16.msra.mxu0 0
  %122 = vmatprep.subr.bf16.mxu0 0
  %123 = vmatpush1.bf16.msra.mxu0 0
  %124 = vmatprep.subr.bf16.mxu0 0
  %125 = vmatpush1.bf16.msra.mxu0 0
  %126 = vmatprep.subr.bf16.mxu0 0
  %127 = vmatpush1.bf16.msra.mxu0 0
  %128 = vmatprep.subr.bf16.mxu0 0
  %129 = vmatpush1.bf16.msra.mxu0 0
  %130 = vmatprep.subr.bf16.mxu0 0
  %131 = vmatpush1.bf16.msra.mxu0 0
  %132 = vmatprep.subr.bf16.mxu0 %v99
  %133 = vmatpush1.bf16.msra.mxu0 %v98
  %134 = vmatprep.subr.bf16.mxu0 0
  %135 = vmatpush2.bf16.msra.mxu0 0
  %136 = vmatprep.subr.bf16.mxu0 0
  %137 = vmatpush2.bf16.msra.mxu0 0
  %138 = vmatprep.subr.bf16.mxu0 0
  %139 = vmatpush2.bf16.msra.mxu0 0
  %140 = vmatprep.subr.bf16.mxu0 0
  %141 = vmatpush2.bf16.msra.mxu0 0
  %142 = vmatprep.subr.bf16.mxu0 0
  %143 = vmatpush2.bf16.msra.mxu0 0
  %144 = vmatprep.subr.bf16.mxu0 0
  %145 = vmatpush2.bf16.msra.mxu0 0
  %146 = vmatprep.subr.bf16.mxu0 0
  %147 = vmatpush2.bf16.msra.mxu0 0
  %148 = vmatprep.subr.bf16.mxu0 0
  %149 = vmatpush2.bf16.msra.mxu0 0
  %150 = vmatprep.mubr.bf16.mxu0 0
  %151 = vmatmul.mubr.bf16.gmra.mxu0 %v116
  %v152 = vpop.f32.mrf.mxu0
  %v153 = vadd.f32 %v37, %v152
  %v154 = vpop.f32.mrf.mxu0
  %v155 = vadd.f32 %v41, %v154
  %v156 = vpop.f32.mrf.mxu0
  %v157 = vadd.f32 %v37, %v156
  %v158 = vpop.f32.mrf.mxu0
  %v159 = vadd.f32 %v41, %v158
  %160 = vdwg.mxu0
  %161 = vmatprep.subr.bf16.mxu0 0
  %162 = vmatpush1.bf16.msra.mxu0 0
  %163 = vmatprep.subr.bf16.mxu0 0
  %164 = vmatpush1.bf16.msra.mxu0 0
  %165 = vmatprep.subr.bf16.mxu0 0
  %166 = vmatpush1.bf16.msra.mxu0 0
  %167 = vmatprep.subr.bf16.mxu0 0
  %168 = vmatpush1.bf16.msra.mxu0 0
  %169 = vmatprep.subr.bf16.mxu0 0
  %170 = vmatpush1.bf16.msra.mxu0 0
  %171 = vmatprep.subr.bf16.mxu0 0
  %172 = vmatpush1.bf16.msra.mxu0 0
  %173 = vmatprep.subr.bf16.mxu0 0
  %174 = vmatpush1.bf16.msra.mxu0 0
  %175 = vmatprep.subr.bf16.mxu0 %v101
  %176 = vmatpush1.bf16.msra.mxu0 %v100
  %177 = vmatprep.subr.bf16.mxu0 0
  %178 = vmatpush2.bf16.msra.mxu0 0
  %179 = vmatprep.subr.bf16.mxu0 0
  %180 = vmatpush2.bf16.msra.mxu0 0
  %181 = vmatprep.subr.bf16.mxu0 0
  %182 = vmatpush2.bf16.msra.mxu0 0
  %183 = vmatprep.subr.bf16.mxu0 0
  %184 = vmatpush2.bf16.msra.mxu0 0
  %185 = vmatprep.subr.bf16.mxu0 0
  %186 = vmatpush2.bf16.msra.mxu0 0
  %187 = vmatprep.subr.bf16.mxu0 0
  %188 = vmatpush2.bf16.msra.mxu0 0
  %189 = vmatprep.subr.bf16.mxu0 0
  %190 = vmatpush2.bf16.msra.mxu0 0
  %191 = vmatprep.subr.bf16.mxu0 0
  %192 = vmatpush2.bf16.msra.mxu0 0
  %193 = vmatprep.mubr.bf16.mxu0 0
  %194 = vmatmul.mubr.bf16.gmra.mxu0 %v116
  %v195 = vpop.f32.mrf.mxu0
  %v196 = vadd.f32 %v45, %v195
  %v197 = vpop.f32.mrf.mxu0
  %v198 = vadd.f32 %v49, %v197
  %v199 = vpop.f32.mrf.mxu0
  %v200 = vadd.f32 %v45, %v199
  %v201 = vpop.f32.mrf.mxu0
  %v202 = vadd.f32 %v49, %v201
  %203 = vdwg.mxu0
  %204 = vmatprep.subr.bf16.mxu0 0
  %205 = vmatpush1.bf16.msra.mxu0 0
  %206 = vmatprep.subr.bf16.mxu0 0
  %207 = vmatpush1.bf16.msra.mxu0 0
  %208 = vmatprep.subr.bf16.mxu0 0
  %209 = vmatpush1.bf16.msra.mxu0 0
  %210 = vmatprep.subr.bf16.mxu0 0
  %211 = vmatpush1.bf16.msra.mxu0 0
  %212 = vmatprep.subr.bf16.mxu0 0
  %213 = vmatpush1.bf16.msra.mxu0 0
  %214 = vmatprep.subr.bf16.mxu0 0
  %215 = vmatpush1.bf16.msra.mxu0 0
  %216 = vmatprep.subr.bf16.mxu0 0
  %217 = vmatpush1.bf16.msra.mxu0 0
  %218 = vmatprep.subr.bf16.mxu0 %v103
  %219 = vmatpush1.bf16.msra.mxu0 %v102
  %220 = vmatprep.subr.bf16.mxu0 0
  %221 = vmatpush2.bf16.msra.mxu0 0
  %222 = vmatprep.subr.bf16.mxu0 0
  %223 = vmatpush2.bf16.msra.mxu0 0
  %224 = vmatprep.subr.bf16.mxu0 0
  %225 = vmatpush2.bf16.msra.mxu0 0
  %226 = vmatprep.subr.bf16.mxu0 0
  %227 = vmatpush2.bf16.msra.mxu0 0
  %228 = vmatprep.subr.bf16.mxu0 0
  %229 = vmatpush2.bf16.msra.mxu0 0
  %230 = vmatprep.subr.bf16.mxu0 0
  %231 = vmatpush2.bf16.msra.mxu0 0
  %232 = vmatprep.subr.bf16.mxu0 0
  %233 = vmatpush2.bf16.msra.mxu0 0
  %234 = vmatprep.subr.bf16.mxu0 0
  %235 = vmatpush2.bf16.msra.mxu0 0
  %236 = vmatprep.mubr.bf16.mxu0 0
  %237 = vmatmul.mubr.bf16.gmra.mxu0 %v116
  %v238 = vpop.f32.mrf.mxu0
  %v239 = vadd.f32 %v53, %v238
  %v240 = vpop.f32.mrf.mxu0
  %v241 = vadd.f32 %v57, %v240
  %v242 = vpop.f32.mrf.mxu0
  %v243 = vadd.f32 %v53, %v242
  %v244 = vpop.f32.mrf.mxu0
  %v245 = vadd.f32 %v57, %v244
  %246 = vdwg.mxu0
  %247 = vmatprep.subr.bf16.mxu0 0
  %248 = vmatpush1.bf16.msra.mxu0 0
  %249 = vmatprep.subr.bf16.mxu0 0
  %250 = vmatpush1.bf16.msra.mxu0 0
  %251 = vmatprep.subr.bf16.mxu0 0
  %252 = vmatpush1.bf16.msra.mxu0 0
  %253 = vmatprep.subr.bf16.mxu0 0
  %254 = vmatpush1.bf16.msra.mxu0 0
  %255 = vmatprep.subr.bf16.mxu0 0
  %256 = vmatpush1.bf16.msra.mxu0 0
  %257 = vmatprep.subr.bf16.mxu0 0
  %258 = vmatpush1.bf16.msra.mxu0 0
  %259 = vmatprep.subr.bf16.mxu0 0
  %260 = vmatpush1.bf16.msra.mxu0 0
  %261 = vmatprep.subr.bf16.mxu0 %v105
  %262 = vmatpush1.bf16.msra.mxu0 %v104
  %263 = vmatprep.subr.bf16.mxu0 0
  %264 = vmatpush2.bf16.msra.mxu0 0
  %265 = vmatprep.subr.bf16.mxu0 0
  %266 = vmatpush2.bf16.msra.mxu0 0
  %267 = vmatprep.subr.bf16.mxu0 0
  %268 = vmatpush2.bf16.msra.mxu0 0
  %269 = vmatprep.subr.bf16.mxu0 0
  %270 = vmatpush2.bf16.msra.mxu0 0
  %271 = vmatprep.subr.bf16.mxu0 0
  %272 = vmatpush2.bf16.msra.mxu0 0
  %273 = vmatprep.subr.bf16.mxu0 0
  %274 = vmatpush2.bf16.msra.mxu0 0
  %275 = vmatprep.subr.bf16.mxu0 0
  %276 = vmatpush2.bf16.msra.mxu0 0
  %277 = vmatprep.subr.bf16.mxu0 0
  %278 = vmatpush2.bf16.msra.mxu0 0
  %279 = vmatprep.mubr.bf16.mxu0 0
  %280 = vmatmul.mubr.bf16.gmra.mxu0 %v116
  %v281 = vpop.f32.mrf.mxu0
  %v282 = vadd.f32 %v61, %v281
  %v283 = vpop.f32.mrf.mxu0
  %v284 = vadd.f32 %v65, %v283
  %v285 = vpop.f32.mrf.mxu0
  %v286 = vadd.f32 %v61, %v285
  %v287 = vpop.f32.mrf.mxu0
  %v288 = vadd.f32 %v65, %v287
  %289 = vdwg.mxu0
  %v290 = vmax.f32 %v153, 0.0
  %v291 = vmax.f32 %v155, 0.0
  %v292 = vmax.f32 %v196, 0.0
  %v293 = vmax.f32 %v198, 0.0
  %v294 = vmax.f32 %v239, 0.0
  %v295 = vmax.f32 %v241, 0.0
  %v296 = vmax.f32 %v282, 0.0
  %v297 = vmax.f32 %v284, 0.0
  %v298 = vmax.f32 %v157, 0.0
  %v299 = vmax.f32 %v159, 0.0
  %v300 = vmax.f32 %v200, 0.0
  %v301 = vmax.f32 %v202, 0.0
  %v302 = vmax.f32 %v243, 0.0
  %v303 = vmax.f32 %v245, 0.0
  %v304 = vmax.f32 %v286, 0.0
  %v305 = vmax.f32 %v288, 0.0
  %v306 = vpack.c.bf16 %v298, %v290
  %v307 = vpack.c.bf16 %v299, %v291
  %v308 = vpack.c.bf16 %v300, %v292
  %v309 = vpack.c.bf16 %v301, %v293
  %v310 = vpack.c.bf16 %v302, %v294
  %v311 = vpack.c.bf16 %v303, %v295
  %v312 = vpack.c.bf16 %v304, %v296
  %v313 = vpack.c.bf16 %v305, %v297
  %v314 = vld [vmem:[%s2] sm:$0xff]
  %v315 = vld [vmem:[%s2 + $0x8] sm:$0xff]
  %v316 = vld [vmem:[%s2 + $0x10] sm:$0xff]
  %v317 = vld [vmem:[%s2 + $0x18] sm:$0xff]
  %v318 = vld [vmem:[%s2 + $0x20] sm:$0xff]
  %v319 = vld [vmem:[%s2 + $0x28] sm:$0xff]
  %v320 = vld [vmem:[%s2 + $0x30] sm:$0xff]
  %v321 = vld [vmem:[%s2 + $0x38] sm:$0xff]
  %v322 = vld [vmem:[%s2 + $0x40] sm:$0xff]
  %v323 = vld [vmem:[%s2 + $0x48] sm:$0xff]
  %v324 = vld [vmem:[%s2 + $0x50] sm:$0xff]
  %v325 = vld [vmem:[%s2 + $0x58] sm:$0xff]
  %v326 = vld [vmem:[%s2 + $0x60] sm:$0xff]
  %v327 = vld [vmem:[%s2 + $0x68] sm:$0xff]
  %v328 = vld [vmem:[%s2 + $0x70] sm:$0xff]
  %v329 = vld [vmem:[%s2 + $0x78] sm:$0xff]
  %v330 = vld [vmem:[%s2 + $0x80] sm:$0xff]
  %v331 = vld [vmem:[%s2 + $0x88] sm:$0xff]
  %v332 = vld [vmem:[%s2 + $0x90] sm:$0xff]
  %v333 = vld [vmem:[%s2 + $0x98] sm:$0xff]
  %v334 = vld [vmem:[%s2 + $0xa0] sm:$0xff]
  %v335 = vld [vmem:[%s2 + $0xa8] sm:$0xff]
  %v336 = vld [vmem:[%s2 + $0xb0] sm:$0xff]
  %v337 = vld [vmem:[%s2 + $0xb8] sm:$0xff]
  %v338 = vld [vmem:[%s2 + $0xc0] sm:$0xff]
  %v339 = vld [vmem:[%s2 + $0xc8] sm:$0xff]
  %v340 = vld [vmem:[%s2 + $0xd0] sm:$0xff]
  %v341 = vld [vmem:[%s2 + $0xd8] sm:$0xff]
  %v342 = vld [vmem:[%s2 + $0xe0] sm:$0xff]
  %v343 = vld [vmem:[%s2 + $0xe8] sm:$0xff]
  %v344 = vld [vmem:[%s2 + $0xf0] sm:$0xff]
  %v345 = vld [vmem:[%s2 + $0xf8] sm:$0xff]
  %v346 = vld [vmem:[%s2 + $0x100] sm:$0xff]
  %v347 = vld [vmem:[%s2 + $0x108] sm:$0xff]
  %v348 = vld [vmem:[%s2 + $0x110] sm:$0xff]
  %v349 = vld [vmem:[%s2 + $0x118] sm:$0xff]
  %v350 = vld [vmem:[%s2 + $0x120] sm:$0xff]
  %v351 = vld [vmem:[%s2 + $0x128] sm:$0xff]
  %v352 = vld [vmem:[%s2 + $0x130] sm:$0xff]
  %v353 = vld [vmem:[%s2 + $0x138] sm:$0xff]
  %v354 = vld [vmem:[%s2 + $0x140] sm:$0xff]
  %v355 = vld [vmem:[%s2 + $0x148] sm:$0xff]
  %v356 = vld [vmem:[%s2 + $0x150] sm:$0xff]
  %v357 = vld [vmem:[%s2 + $0x158] sm:$0xff]
  %v358 = vld [vmem:[%s2 + $0x160] sm:$0xff]
  %v359 = vld [vmem:[%s2 + $0x168] sm:$0xff]
  %v360 = vld [vmem:[%s2 + $0x170] sm:$0xff]
  %v361 = vld [vmem:[%s2 + $0x178] sm:$0xff]
  %v362 = vld [vmem:[%s2 + $0x180] sm:$0xff]
  %v363 = vld [vmem:[%s2 + $0x188] sm:$0xff]
  %v364 = vld [vmem:[%s2 + $0x190] sm:$0xff]
  %v365 = vld [vmem:[%s2 + $0x198] sm:$0xff]
  %v366 = vld [vmem:[%s2 + $0x1a0] sm:$0xff]
  %v367 = vld [vmem:[%s2 + $0x1a8] sm:$0xff]
  %v368 = vld [vmem:[%s2 + $0x1b0] sm:$0xff]
  %v369 = vld [vmem:[%s2 + $0x1b8] sm:$0xff]
  %v370 = vld [vmem:[%s2 + $0x1c0] sm:$0xff]
  %v371 = vld [vmem:[%s2 + $0x1c8] sm:$0xff]
  %v372 = vld [vmem:[%s2 + $0x1d0] sm:$0xff]
  %v373 = vld [vmem:[%s2 + $0x1d8] sm:$0xff]
  %v374 = vld [vmem:[%s2 + $0x1e0] sm:$0xff]
  %v375 = vld [vmem:[%s2 + $0x1e8] sm:$0xff]
  %v376 = vld [vmem:[%s2 + $0x1f0] sm:$0xff]
  %v377 = vld [vmem:[%s2 + $0x1f8] sm:$0xff]
  %v378 = vld [vmem:[%s2 + $0x200] sm:$0xff]
  %v379 = vld [vmem:[%s2 + $0x208] sm:$0xff]
  %v380 = vld [vmem:[%s2 + $0x210] sm:$0xff]
  %v381 = vld [vmem:[%s2 + $0x218] sm:$0xff]
  %v382 = vld [vmem:[%s2 + $0x220] sm:$0xff]
  %v383 = vld [vmem:[%s2 + $0x228] sm:$0xff]
  %v384 = vld [vmem:[%s2 + $0x230] sm:$0xff]
  %v385 = vld [vmem:[%s2 + $0x238] sm:$0xff]
  %v386 = vld [vmem:[%s2 + $0x240] sm:$0xff]
  %v387 = vld [vmem:[%s2 + $0x248] sm:$0xff]
  %v388 = vld [vmem:[%s2 + $0x250] sm:$0xff]
  %v389 = vld [vmem:[%s2 + $0x258] sm:$0xff]
  %v390 = vld [vmem:[%s2 + $0x260] sm:$0xff]
  %v391 = vld [vmem:[%s2 + $0x268] sm:$0xff]
  %v392 = vld [vmem:[%s2 + $0x270] sm:$0xff]
  %v393 = vld [vmem:[%s2 + $0x278] sm:$0xff]
  %v394 = vld [vmem:[%s2 + $0x280] sm:$0xff]
  %v395 = vld [vmem:[%s2 + $0x288] sm:$0xff]
  %v396 = vld [vmem:[%s2 + $0x290] sm:$0xff]
  %v397 = vld [vmem:[%s2 + $0x298] sm:$0xff]
  %v398 = vld [vmem:[%s2 + $0x2a0] sm:$0xff]
  %v399 = vld [vmem:[%s2 + $0x2a8] sm:$0xff]
  %v400 = vld [vmem:[%s2 + $0x2b0] sm:$0xff]
  %v401 = vld [vmem:[%s2 + $0x2b8] sm:$0xff]
  %v402 = vld [vmem:[%s2 + $0x2c0] sm:$0xff]
  %v403 = vld [vmem:[%s2 + $0x2c8] sm:$0xff]
  %v404 = vld [vmem:[%s2 + $0x2d0] sm:$0xff]
  %v405 = vld [vmem:[%s2 + $0x2d8] sm:$0xff]
  %v406 = vld [vmem:[%s2 + $0x2e0] sm:$0xff]
  %v407 = vld [vmem:[%s2 + $0x2e8] sm:$0xff]
  %v408 = vld [vmem:[%s2 + $0x2f0] sm:$0xff]
  %v409 = vld [vmem:[%s2 + $0x2f8] sm:$0xff]
  %v410 = vld [vmem:[%s2 + $0x300] sm:$0xff]
  %v411 = vld [vmem:[%s2 + $0x308] sm:$0xff]
  %v412 = vld [vmem:[%s2 + $0x310] sm:$0xff]
  %v413 = vld [vmem:[%s2 + $0x318] sm:$0xff]
  %v414 = vld [vmem:[%s2 + $0x320] sm:$0xff]
  %v415 = vld [vmem:[%s2 + $0x328] sm:$0xff]
  %v416 = vld [vmem:[%s2 + $0x330] sm:$0xff]
  %v417 = vld [vmem:[%s2 + $0x338] sm:$0xff]
  %v418 = vld [vmem:[%s2 + $0x340] sm:$0xff]
  %v419 = vld [vmem:[%s2 + $0x348] sm:$0xff]
  %v420 = vld [vmem:[%s2 + $0x350] sm:$0xff]
  %v421 = vld [vmem:[%s2 + $0x358] sm:$0xff]
  %v422 = vld [vmem:[%s2 + $0x360] sm:$0xff]
  %v423 = vld [vmem:[%s2 + $0x368] sm:$0xff]
  %v424 = vld [vmem:[%s2 + $0x370] sm:$0xff]
  %v425 = vld [vmem:[%s2 + $0x378] sm:$0xff]
  %v426 = vld [vmem:[%s2 + $0x380] sm:$0xff]
  %v427 = vld [vmem:[%s2 + $0x388] sm:$0xff]
  %v428 = vld [vmem:[%s2 + $0x390] sm:$0xff]
  %v429 = vld [vmem:[%s2 + $0x398] sm:$0xff]
  %v430 = vld [vmem:[%s2 + $0x3a0] sm:$0xff]
  %v431 = vld [vmem:[%s2 + $0x3a8] sm:$0xff]
  %v432 = vld [vmem:[%s2 + $0x3b0] sm:$0xff]
  %v433 = vld [vmem:[%s2 + $0x3b8] sm:$0xff]
  %v434 = vld [vmem:[%s2 + $0x3c0] sm:$0xff]
  %v435 = vld [vmem:[%s2 + $0x3c8] sm:$0xff]
  %v436 = vld [vmem:[%s2 + $0x3d0] sm:$0xff]
  %v437 = vld [vmem:[%s2 + $0x3d8] sm:$0xff]
  %v438 = vld [vmem:[%s2 + $0x3e0] sm:$0xff]
  %v439 = vld [vmem:[%s2 + $0x3e8] sm:$0xff]
  %v440 = vld [vmem:[%s2 + $0x3f0] sm:$0xff]
  %v441 = vld [vmem:[%s2 + $0x3f8] sm:$0xff]
  %v570 = vunpack.c.l.b16 %v314
  %v571 = vunpack.c.h.b16 %v314
  %v572 = vunpack.c.l.b16 %v315
  %v573 = vunpack.c.h.b16 %v315
  %v574 = vunpack.c.l.b16 %v316
  %v575 = vunpack.c.h.b16 %v316
  %v576 = vunpack.c.l.b16 %v317
  %v577 = vunpack.c.h.b16 %v317
  %v578 = vunpack.c.l.b16 %v318
  %v579 = vunpack.c.h.b16 %v318
  %v580 = vunpack.c.l.b16 %v319
  %v581 = vunpack.c.h.b16 %v319
  %v582 = vunpack.c.l.b16 %v320
  %v583 = vunpack.c.h.b16 %v320
  %v584 = vunpack.c.l.b16 %v321
  %v585 = vunpack.c.h.b16 %v321
  %v586 = vunpack.c.l.b16 %v322
  %v587 = vunpack.c.h.b16 %v322
  %v588 = vunpack.c.l.b16 %v323
  %v589 = vunpack.c.h.b16 %v323
  %v590 = vunpack.c.l.b16 %v324
  %v591 = vunpack.c.h.b16 %v324
  %v592 = vunpack.c.l.b16 %v325
  %v593 = vunpack.c.h.b16 %v325
  %v594 = vunpack.c.l.b16 %v326
  %v595 = vunpack.c.h.b16 %v326
  %v596 = vunpack.c.l.b16 %v327
  %v597 = vunpack.c.h.b16 %v327
  %v598 = vunpack.c.l.b16 %v328
  %v599 = vunpack.c.h.b16 %v328
  %v600 = vunpack.c.l.b16 %v329
  %v601 = vunpack.c.h.b16 %v329
  %v602 = vunpack.c.l.b16 %v330
  %v603 = vunpack.c.h.b16 %v330
  %v604 = vunpack.c.l.b16 %v331
  %v605 = vunpack.c.h.b16 %v331
  %v606 = vunpack.c.l.b16 %v332
  %v607 = vunpack.c.h.b16 %v332
  %v608 = vunpack.c.l.b16 %v333
  %v609 = vunpack.c.h.b16 %v333
  %v610 = vunpack.c.l.b16 %v334
  %v611 = vunpack.c.h.b16 %v334
  %v612 = vunpack.c.l.b16 %v335
  %v613 = vunpack.c.h.b16 %v335
  %v614 = vunpack.c.l.b16 %v336
  %v615 = vunpack.c.h.b16 %v336
  %v616 = vunpack.c.l.b16 %v337
  %v617 = vunpack.c.h.b16 %v337
  %v618 = vunpack.c.l.b16 %v338
  %v619 = vunpack.c.h.b16 %v338
  %v620 = vunpack.c.l.b16 %v339
  %v621 = vunpack.c.h.b16 %v339
  %v622 = vunpack.c.l.b16 %v340
  %v623 = vunpack.c.h.b16 %v340
  %v624 = vunpack.c.l.b16 %v341
  %v625 = vunpack.c.h.b16 %v341
  %v626 = vunpack.c.l.b16 %v342
  %v627 = vunpack.c.h.b16 %v342
  %v628 = vunpack.c.l.b16 %v343
  %v629 = vunpack.c.h.b16 %v343
  %v630 = vunpack.c.l.b16 %v344
  %v631 = vunpack.c.h.b16 %v344
  %v632 = vunpack.c.l.b16 %v345
  %v633 = vunpack.c.h.b16 %v345
  %v634 = vunpack.c.l.b16 %v346
  %v635 = vunpack.c.h.b16 %v346
  %v636 = vunpack.c.l.b16 %v347
  %v637 = vunpack.c.h.b16 %v347
  %v638 = vunpack.c.l.b16 %v348
  %v639 = vunpack.c.h.b16 %v348
  %v640 = vunpack.c.l.b16 %v349
  %v641 = vunpack.c.h.b16 %v349
  %v642 = vunpack.c.l.b16 %v350
  %v643 = vunpack.c.h.b16 %v350
  %v644 = vunpack.c.l.b16 %v351
  %v645 = vunpack.c.h.b16 %v351
  %v646 = vunpack.c.l.b16 %v352
  %v647 = vunpack.c.h.b16 %v352
  %v648 = vunpack.c.l.b16 %v353
  %v649 = vunpack.c.h.b16 %v353
  %v650 = vunpack.c.l.b16 %v354
  %v651 = vunpack.c.h.b16 %v354
  %v652 = vunpack.c.l.b16 %v355
  %v653 = vunpack.c.h.b16 %v355
  %v654 = vunpack.c.l.b16 %v356
  %v655 = vunpack.c.h.b16 %v356
  %v656 = vunpack.c.l.b16 %v357
  %v657 = vunpack.c.h.b16 %v357
  %v658 = vunpack.c.l.b16 %v358
  %v659 = vunpack.c.h.b16 %v358
  %v660 = vunpack.c.l.b16 %v359
  %v661 = vunpack.c.h.b16 %v359
  %v662 = vunpack.c.l.b16 %v360
  %v663 = vunpack.c.h.b16 %v360
  %v664 = vunpack.c.l.b16 %v361
  %v665 = vunpack.c.h.b16 %v361
  %v666 = vunpack.c.l.b16 %v362
  %v667 = vunpack.c.h.b16 %v362
  %v668 = vunpack.c.l.b16 %v363
  %v669 = vunpack.c.h.b16 %v363
  %v670 = vunpack.c.l.b16 %v364
  %v671 = vunpack.c.h.b16 %v364
  %v672 = vunpack.c.l.b16 %v365
  %v673 = vunpack.c.h.b16 %v365
  %v674 = vunpack.c.l.b16 %v366
  %v675 = vunpack.c.h.b16 %v366
  %v676 = vunpack.c.l.b16 %v367
  %v677 = vunpack.c.h.b16 %v367
  %v678 = vunpack.c.l.b16 %v368
  %v679 = vunpack.c.h.b16 %v368
  %v680 = vunpack.c.l.b16 %v369
  %v681 = vunpack.c.h.b16 %v369
  %v682 = vunpack.c.l.b16 %v370
  %v683 = vunpack.c.h.b16 %v370
  %v684 = vunpack.c.l.b16 %v371
  %v685 = vunpack.c.h.b16 %v371
  %v686 = vunpack.c.l.b16 %v372
  %v687 = vunpack.c.h.b16 %v372
  %v688 = vunpack.c.l.b16 %v373
  %v689 = vunpack.c.h.b16 %v373
  %v690 = vunpack.c.l.b16 %v374
  %v691 = vunpack.c.h.b16 %v374
  %v692 = vunpack.c.l.b16 %v375
  %v693 = vunpack.c.h.b16 %v375
  %v694 = vunpack.c.l.b16 %v376
  %v695 = vunpack.c.h.b16 %v376
  %v696 = vunpack.c.l.b16 %v377
  %v697 = vunpack.c.h.b16 %v377
  %v698 = vunpack.c.l.b16 %v378
  %v699 = vunpack.c.h.b16 %v378
  %v700 = vunpack.c.l.b16 %v379
  %v701 = vunpack.c.h.b16 %v379
  %v702 = vunpack.c.l.b16 %v380
  %v703 = vunpack.c.h.b16 %v380
  %v704 = vunpack.c.l.b16 %v381
  %v705 = vunpack.c.h.b16 %v381
  %v706 = vunpack.c.l.b16 %v382
  %v707 = vunpack.c.h.b16 %v382
  %v708 = vunpack.c.l.b16 %v383
  %v709 = vunpack.c.h.b16 %v383
  %v710 = vunpack.c.l.b16 %v384
  %v711 = vunpack.c.h.b16 %v384
  %v712 = vunpack.c.l.b16 %v385
  %v713 = vunpack.c.h.b16 %v385
  %v714 = vunpack.c.l.b16 %v386
  %v715 = vunpack.c.h.b16 %v386
  %v716 = vunpack.c.l.b16 %v387
  %v717 = vunpack.c.h.b16 %v387
  %v718 = vunpack.c.l.b16 %v388
  %v719 = vunpack.c.h.b16 %v388
  %v720 = vunpack.c.l.b16 %v389
  %v721 = vunpack.c.h.b16 %v389
  %v722 = vunpack.c.l.b16 %v390
  %v723 = vunpack.c.h.b16 %v390
  %v724 = vunpack.c.l.b16 %v391
  %v725 = vunpack.c.h.b16 %v391
  %v726 = vunpack.c.l.b16 %v392
  %v727 = vunpack.c.h.b16 %v392
  %v728 = vunpack.c.l.b16 %v393
  %v729 = vunpack.c.h.b16 %v393
  %v730 = vunpack.c.l.b16 %v394
  %v731 = vunpack.c.h.b16 %v394
  %v732 = vunpack.c.l.b16 %v395
  %v733 = vunpack.c.h.b16 %v395
  %v734 = vunpack.c.l.b16 %v396
  %v735 = vunpack.c.h.b16 %v396
  %v736 = vunpack.c.l.b16 %v397
  %v737 = vunpack.c.h.b16 %v397
  %v738 = vunpack.c.l.b16 %v398
  %v739 = vunpack.c.h.b16 %v398
  %v740 = vunpack.c.l.b16 %v399
  %v741 = vunpack.c.h.b16 %v399
  %v742 = vunpack.c.l.b16 %v400
  %v743 = vunpack.c.h.b16 %v400
  %v744 = vunpack.c.l.b16 %v401
  %v745 = vunpack.c.h.b16 %v401
  %v746 = vunpack.c.l.b16 %v402
  %v747 = vunpack.c.h.b16 %v402
  %v748 = vunpack.c.l.b16 %v403
  %v749 = vunpack.c.h.b16 %v403
  %v750 = vunpack.c.l.b16 %v404
  %v751 = vunpack.c.h.b16 %v404
  %v752 = vunpack.c.l.b16 %v405
  %v753 = vunpack.c.h.b16 %v405
  %v754 = vunpack.c.l.b16 %v406
  %v755 = vunpack.c.h.b16 %v406
  %v756 = vunpack.c.l.b16 %v407
  %v757 = vunpack.c.h.b16 %v407
  %v758 = vunpack.c.l.b16 %v408
  %v759 = vunpack.c.h.b16 %v408
  %v760 = vunpack.c.l.b16 %v409
  %v761 = vunpack.c.h.b16 %v409
  %v762 = vunpack.c.l.b16 %v410
  %v763 = vunpack.c.h.b16 %v410
  %v764 = vunpack.c.l.b16 %v411
  %v765 = vunpack.c.h.b16 %v411
  %v766 = vunpack.c.l.b16 %v412
  %v767 = vunpack.c.h.b16 %v412
  %v768 = vunpack.c.l.b16 %v413
  %v769 = vunpack.c.h.b16 %v413
  %v770 = vunpack.c.l.b16 %v414
  %v771 = vunpack.c.h.b16 %v414
  %v772 = vunpack.c.l.b16 %v415
  %v773 = vunpack.c.h.b16 %v415
  %v774 = vunpack.c.l.b16 %v416
  %v775 = vunpack.c.h.b16 %v416
  %v776 = vunpack.c.l.b16 %v417
  %v777 = vunpack.c.h.b16 %v417
  %v778 = vunpack.c.l.b16 %v418
  %v779 = vunpack.c.h.b16 %v418
  %v780 = vunpack.c.l.b16 %v419
  %v781 = vunpack.c.h.b16 %v419
  %v782 = vunpack.c.l.b16 %v420
  %v783 = vunpack.c.h.b16 %v420
  %v784 = vunpack.c.l.b16 %v421
  %v785 = vunpack.c.h.b16 %v421
  %v786 = vunpack.c.l.b16 %v422
  %v787 = vunpack.c.h.b16 %v422
  %v788 = vunpack.c.l.b16 %v423
  %v789 = vunpack.c.h.b16 %v423
  %v790 = vunpack.c.l.b16 %v424
  %v791 = vunpack.c.h.b16 %v424
  %v792 = vunpack.c.l.b16 %v425
  %v793 = vunpack.c.h.b16 %v425
  %v794 = vunpack.c.l.b16 %v426
  %v795 = vunpack.c.h.b16 %v426
  %v796 = vunpack.c.l.b16 %v427
  %v797 = vunpack.c.h.b16 %v427
  %v798 = vunpack.c.l.b16 %v428
  %v799 = vunpack.c.h.b16 %v428
  %v800 = vunpack.c.l.b16 %v429
  %v801 = vunpack.c.h.b16 %v429
  %v802 = vunpack.c.l.b16 %v430
  %v803 = vunpack.c.h.b16 %v430
  %v804 = vunpack.c.l.b16 %v431
  %v805 = vunpack.c.h.b16 %v431
  %v806 = vunpack.c.l.b16 %v432
  %v807 = vunpack.c.h.b16 %v432
  %v808 = vunpack.c.l.b16 %v433
  %v809 = vunpack.c.h.b16 %v433
  %v810 = vunpack.c.l.b16 %v434
  %v811 = vunpack.c.h.b16 %v434
  %v812 = vunpack.c.l.b16 %v435
  %v813 = vunpack.c.h.b16 %v435
  %v814 = vunpack.c.l.b16 %v436
  %v815 = vunpack.c.h.b16 %v436
  %v816 = vunpack.c.l.b16 %v437
  %v817 = vunpack.c.h.b16 %v437
  %v818 = vunpack.c.l.b16 %v438
  %v819 = vunpack.c.h.b16 %v438
  %v820 = vunpack.c.l.b16 %v439
  %v821 = vunpack.c.h.b16 %v439
  %v822 = vunpack.c.l.b16 %v440
  %v823 = vunpack.c.h.b16 %v440
  %v824 = vunpack.c.l.b16 %v441
  %v825 = vunpack.c.h.b16 %v441
  %v826 = vpack.c.b16 %v574, %v570
  %v827 = vpack.c.b16 %v575, %v571
  %v828 = vpack.c.b16 %v576, %v572
  %v829 = vpack.c.b16 %v577, %v573
  %v830 = vpack.c.b16 %v582, %v578
  %v831 = vpack.c.b16 %v583, %v579
  %v832 = vpack.c.b16 %v584, %v580
  %v833 = vpack.c.b16 %v585, %v581
  %v834 = vpack.c.b16 %v590, %v586
  %v835 = vpack.c.b16 %v591, %v587
  %v836 = vpack.c.b16 %v592, %v588
  %v837 = vpack.c.b16 %v593, %v589
  %v838 = vpack.c.b16 %v598, %v594
  %v839 = vpack.c.b16 %v599, %v595
  %v840 = vpack.c.b16 %v600, %v596
  %v841 = vpack.c.b16 %v601, %v597
  %v842 = vpack.c.b16 %v606, %v602
  %v843 = vpack.c.b16 %v607, %v603
  %v844 = vpack.c.b16 %v608, %v604
  %v845 = vpack.c.b16 %v609, %v605
  %v846 = vpack.c.b16 %v614, %v610
  %v847 = vpack.c.b16 %v615, %v611
  %v848 = vpack.c.b16 %v616, %v612
  %v849 = vpack.c.b16 %v617, %v613
  %v850 = vpack.c.b16 %v622, %v618
  %v851 = vpack.c.b16 %v623, %v619
  %v852 = vpack.c.b16 %v624, %v620
  %v853 = vpack.c.b16 %v625, %v621
  %v854 = vpack.c.b16 %v630, %v626
  %v855 = vpack.c.b16 %v631, %v627
  %v856 = vpack.c.b16 %v632, %v628
  %v857 = vpack.c.b16 %v633, %v629
  %v858 = vpack.c.b16 %v638, %v634
  %v859 = vpack.c.b16 %v639, %v635
  %v860 = vpack.c.b16 %v640, %v636
  %v861 = vpack.c.b16 %v641, %v637
  %v862 = vpack.c.b16 %v646, %v642
  %v863 = vpack.c.b16 %v647, %v643
  %v864 = vpack.c.b16 %v648, %v644
  %v865 = vpack.c.b16 %v649, %v645
  %v866 = vpack.c.b16 %v654, %v650
  %v867 = vpack.c.b16 %v655, %v651
  %v868 = vpack.c.b16 %v656, %v652
  %v869 = vpack.c.b16 %v657, %v653
  %v870 = vpack.c.b16 %v662, %v658
  %v871 = vpack.c.b16 %v663, %v659
  %v872 = vpack.c.b16 %v664, %v660
  %v873 = vpack.c.b16 %v665, %v661
  %v874 = vpack.c.b16 %v670, %v666
  %v875 = vpack.c.b16 %v671, %v667
  %v876 = vpack.c.b16 %v672, %v668
  %v877 = vpack.c.b16 %v673, %v669
  %v878 = vpack.c.b16 %v678, %v674
  %v879 = vpack.c.b16 %v679, %v675
  %v880 = vpack.c.b16 %v680, %v676
  %v881 = vpack.c.b16 %v681, %v677
  %v882 = vpack.c.b16 %v686, %v682
  %v883 = vpack.c.b16 %v687, %v683
  %v884 = vpack.c.b16 %v688, %v684
  %v885 = vpack.c.b16 %v689, %v685
  %v886 = vpack.c.b16 %v694, %v690
  %v887 = vpack.c.b16 %v695, %v691
  %v888 = vpack.c.b16 %v696, %v692
  %v889 = vpack.c.b16 %v697, %v693
  %v890 = vpack.c.b16 %v702, %v698
  %v891 = vpack.c.b16 %v703, %v699
  %v892 = vpack.c.b16 %v704, %v700
  %v893 = vpack.c.b16 %v705, %v701
  %v894 = vpack.c.b16 %v710, %v706
  %v895 = vpack.c.b16 %v711, %v707
  %v896 = vpack.c.b16 %v712, %v708
  %v897 = vpack.c.b16 %v713, %v709
  %v898 = vpack.c.b16 %v718, %v714
  %v899 = vpack.c.b16 %v719, %v715
  %v900 = vpack.c.b16 %v720, %v716
  %v901 = vpack.c.b16 %v721, %v717
  %v902 = vpack.c.b16 %v726, %v722
  %v903 = vpack.c.b16 %v727, %v723
  %v904 = vpack.c.b16 %v728, %v724
  %v905 = vpack.c.b16 %v729, %v725
  %v906 = vpack.c.b16 %v734, %v730
  %v907 = vpack.c.b16 %v735, %v731
  %v908 = vpack.c.b16 %v736, %v732
  %v909 = vpack.c.b16 %v737, %v733
  %v910 = vpack.c.b16 %v742, %v738
  %v911 = vpack.c.b16 %v743, %v739
  %v912 = vpack.c.b16 %v744, %v740
  %v913 = vpack.c.b16 %v745, %v741
  %v914 = vpack.c.b16 %v750, %v746
  %v915 = vpack.c.b16 %v751, %v747
  %v916 = vpack.c.b16 %v752, %v748
  %v917 = vpack.c.b16 %v753, %v749
  %v918 = vpack.c.b16 %v758, %v754
  %v919 = vpack.c.b16 %v759, %v755
  %v920 = vpack.c.b16 %v760, %v756
  %v921 = vpack.c.b16 %v761, %v757
  %v922 = vpack.c.b16 %v766, %v762
  %v923 = vpack.c.b16 %v767, %v763
  %v924 = vpack.c.b16 %v768, %v764
  %v925 = vpack.c.b16 %v769, %v765
  %v926 = vpack.c.b16 %v774, %v770
  %v927 = vpack.c.b16 %v775, %v771
  %v928 = vpack.c.b16 %v776, %v772
  %v929 = vpack.c.b16 %v777, %v773
  %v930 = vpack.c.b16 %v782, %v778
  %v931 = vpack.c.b16 %v783, %v779
  %v932 = vpack.c.b16 %v784, %v780
  %v933 = vpack.c.b16 %v785, %v781
  %v934 = vpack.c.b16 %v790, %v786
  %v935 = vpack.c.b16 %v791, %v787
  %v936 = vpack.c.b16 %v792, %v788
  %v937 = vpack.c.b16 %v793, %v789
  %v938 = vpack.c.b16 %v798, %v794
  %v939 = vpack.c.b16 %v799, %v795
  %v940 = vpack.c.b16 %v800, %v796
  %v941 = vpack.c.b16 %v801, %v797
  %v942 = vpack.c.b16 %v806, %v802
  %v943 = vpack.c.b16 %v807, %v803
  %v944 = vpack.c.b16 %v808, %v804
  %v945 = vpack.c.b16 %v809, %v805
  %v946 = vpack.c.b16 %v814, %v810
  %v947 = vpack.c.b16 %v815, %v811
  %v948 = vpack.c.b16 %v816, %v812
  %v949 = vpack.c.b16 %v817, %v813
  %v950 = vpack.c.b16 %v822, %v818
  %v951 = vpack.c.b16 %v823, %v819
  %v952 = vpack.c.b16 %v824, %v820
  %v953 = vpack.c.b16 %v825, %v821
  %1082 = vmatprep.subr.bf16.mxu0 %v855
  %1083 = vmatpush1.bf16.msra.mxu0 %v854
  %1084 = vmatprep.subr.bf16.mxu0 %v851
  %1085 = vmatpush1.bf16.msra.mxu0 %v850
  %1086 = vmatprep.subr.bf16.mxu0 %v847
  %1087 = vmatpush1.bf16.msra.mxu0 %v846
  %1088 = vmatprep.subr.bf16.mxu0 %v843
  %1089 = vmatpush1.bf16.msra.mxu0 %v842
  %1090 = vmatprep.subr.bf16.mxu0 %v839
  %1091 = vmatpush1.bf16.msra.mxu0 %v838
  %1092 = vmatprep.subr.bf16.mxu0 %v835
  %1093 = vmatpush1.bf16.msra.mxu0 %v834
  %1094 = vmatprep.subr.bf16.mxu0 %v831
  %1095 = vmatpush1.bf16.msra.mxu0 %v830
  %1096 = vmatprep.subr.bf16.mxu0 %v827
  %1097 = vmatpush1.bf16.msra.mxu0 %v826
  %1098 = vmatprep.subr.bf16.mxu0 %v887
  %1099 = vmatpush2.bf16.msra.mxu0 %v886
  %1100 = vmatprep.subr.bf16.mxu0 %v883
  %1101 = vmatpush2.bf16.msra.mxu0 %v882
  %1102 = vmatprep.subr.bf16.mxu0 %v879
  %1103 = vmatpush2.bf16.msra.mxu0 %v878
  %1104 = vmatprep.subr.bf16.mxu0 %v875
  %1105 = vmatpush2.bf16.msra.mxu0 %v874
  %1106 = vmatprep.subr.bf16.mxu0 %v871
  %1107 = vmatpush2.bf16.msra.mxu0 %v870
  %1108 = vmatprep.subr.bf16.mxu0 %v867
  %1109 = vmatpush2.bf16.msra.mxu0 %v866
  %1110 = vmatprep.subr.bf16.mxu0 %v863
  %1111 = vmatpush2.bf16.msra.mxu0 %v862
  %1112 = vmatprep.subr.bf16.mxu0 %v859
  %1113 = vmatpush2.bf16.msra.mxu0 %v858
  %1114 = vmatprep.mubr.bf16.mxu0 %v307
  %1115 = vmatmul.mubr.bf16.gmra.mxu0 %v306
  %v1116 = vpop.f32.mrf.mxu0
  %v1117 = vadd.f32 0.0, %v1116
  %v1118 = vpop.f32.mrf.mxu0
  %v1119 = vadd.f32 0.0, %v1118
  %v1120 = vpop.f32.mrf.mxu0
  %v1121 = vadd.f32 0.0, %v1120
  %v1122 = vpop.f32.mrf.mxu0
  %v1123 = vadd.f32 0.0, %v1122
  %1124 = vdwg.mxu0
  %1125 = vmatprep.subr.bf16.mxu0 %v919
  %1126 = vmatpush1.bf16.msra.mxu0 %v918
  %1127 = vmatprep.subr.bf16.mxu0 %v915
  %1128 = vmatpush1.bf16.msra.mxu0 %v914
  %1129 = vmatprep.subr.bf16.mxu0 %v911
  %1130 = vmatpush1.bf16.msra.mxu0 %v910
  %1131 = vmatprep.subr.bf16.mxu0 %v907
  %1132 = vmatpush1.bf16.msra.mxu0 %v906
  %1133 = vmatprep.subr.bf16.mxu0 %v903
  %1134 = vmatpush1.bf16.msra.mxu0 %v902
  %1135 = vmatprep.subr.bf16.mxu0 %v899
  %1136 = vmatpush1.bf16.msra.mxu0 %v898
  %1137 = vmatprep.subr.bf16.mxu0 %v895
  %1138 = vmatpush1.bf16.msra.mxu0 %v894
  %1139 = vmatprep.subr.bf16.mxu0 %v891
  %1140 = vmatpush1.bf16.msra.mxu0 %v890
  %1141 = vmatprep.subr.bf16.mxu0 %v951
  %1142 = vmatpush2.bf16.msra.mxu0 %v950
  %1143 = vmatprep.subr.bf16.mxu0 %v947
  %1144 = vmatpush2.bf16.msra.mxu0 %v946
  %1145 = vmatprep.subr.bf16.mxu0 %v943
  %1146 = vmatpush2.bf16.msra.mxu0 %v942
  %1147 = vmatprep.subr.bf16.mxu0 %v939
  %1148 = vmatpush2.bf16.msra.mxu0 %v938
  %1149 = vmatprep.subr.bf16.mxu0 %v935
  %1150 = vmatpush2.bf16.msra.mxu0 %v934
  %1151 = vmatprep.subr.bf16.mxu0 %v931
  %1152 = vmatpush2.bf16.msra.mxu0 %v930
  %1153 = vmatprep.subr.bf16.mxu0 %v927
  %1154 = vmatpush2.bf16.msra.mxu0 %v926
  %1155 = vmatprep.subr.bf16.mxu0 %v923
  %1156 = vmatpush2.bf16.msra.mxu0 %v922
  %1157 = vmatprep.mubr.bf16.mxu0 %v309
  %1158 = vmatmul.mubr.bf16.gmra.mxu0 %v308
  %v1159 = vpop.f32.mrf.mxu0
  %v1160 = vadd.f32 %v1117, %v1159
  %v1161 = vpop.f32.mrf.mxu0
  %v1162 = vadd.f32 %v1119, %v1161
  %v1163 = vpop.f32.mrf.mxu0
  %v1164 = vadd.f32 %v1121, %v1163
  %v1165 = vpop.f32.mrf.mxu0
  %v1166 = vadd.f32 %v1123, %v1165
  %1167 = vdwg.mxu0
  %1168 = vmatprep.subr.bf16.mxu0 %v857
  %1169 = vmatpush1.bf16.msra.mxu0 %v856
  %1170 = vmatprep.subr.bf16.mxu0 %v853
  %1171 = vmatpush1.bf16.msra.mxu0 %v852
  %1172 = vmatprep.subr.bf16.mxu0 %v849
  %1173 = vmatpush1.bf16.msra.mxu0 %v848
  %1174 = vmatprep.subr.bf16.mxu0 %v845
  %1175 = vmatpush1.bf16.msra.mxu0 %v844
  %1176 = vmatprep.subr.bf16.mxu0 %v841
  %1177 = vmatpush1.bf16.msra.mxu0 %v840
  %1178 = vmatprep.subr.bf16.mxu0 %v837
  %1179 = vmatpush1.bf16.msra.mxu0 %v836
  %1180 = vmatprep.subr.bf16.mxu0 %v833
  %1181 = vmatpush1.bf16.msra.mxu0 %v832
  %1182 = vmatprep.subr.bf16.mxu0 %v829
  %1183 = vmatpush1.bf16.msra.mxu0 %v828
  %1184 = vmatprep.subr.bf16.mxu0 %v889
  %1185 = vmatpush2.bf16.msra.mxu0 %v888
  %1186 = vmatprep.subr.bf16.mxu0 %v885
  %1187 = vmatpush2.bf16.msra.mxu0 %v884
  %1188 = vmatprep.subr.bf16.mxu0 %v881
  %1189 = vmatpush2.bf16.msra.mxu0 %v880
  %1190 = vmatprep.subr.bf16.mxu0 %v877
  %1191 = vmatpush2.bf16.msra.mxu0 %v876
  %1192 = vmatprep.subr.bf16.mxu0 %v873
  %1193 = vmatpush2.bf16.msra.mxu0 %v872
  %1194 = vmatprep.subr.bf16.mxu0 %v869
  %1195 = vmatpush2.bf16.msra.mxu0 %v868
  %1196 = vmatprep.subr.bf16.mxu0 %v865
  %1197 = vmatpush2.bf16.msra.mxu0 %v864
  %1198 = vmatprep.subr.bf16.mxu0 %v861
  %1199 = vmatpush2.bf16.msra.mxu0 %v860
  %1200 = vmatprep.mubr.bf16.mxu0 %v307
  %1201 = vmatmul.mubr.bf16.gmra.mxu0 %v306
  %v1202 = vpop.f32.mrf.mxu0
  %v1203 = vadd.f32 0.0, %v1202
  %v1204 = vpop.f32.mrf.mxu0
  %v1205 = vadd.f32 0.0, %v1204
  %v1206 = vpop.f32.mrf.mxu0
  %v1207 = vadd.f32 0.0, %v1206
  %v1208 = vpop.f32.mrf.mxu0
  %v1209 = vadd.f32 0.0, %v1208
  %1210 = vdwg.mxu0
  %1211 = vmatprep.subr.bf16.mxu0 %v921
  %1212 = vmatpush1.bf16.msra.mxu0 %v920
  %1213 = vmatprep.subr.bf16.mxu0 %v917
  %1214 = vmatpush1.bf16.msra.mxu0 %v916
  %1215 = vmatprep.subr.bf16.mxu0 %v913
  %1216 = vmatpush1.bf16.msra.mxu0 %v912
  %1217 = vmatprep.subr.bf16.mxu0 %v909
  %1218 = vmatpush1.bf16.msra.mxu0 %v908
  %1219 = vmatprep.subr.bf16.mxu0 %v905
  %1220 = vmatpush1.bf16.msra.mxu0 %v904
  %1221 = vmatprep.subr.bf16.mxu0 %v901
  %1222 = vmatpush1.bf16.msra.mxu0 %v900
  %1223 = vmatprep.subr.bf16.mxu0 %v897
  %1224 = vmatpush1.bf16.msra.mxu0 %v896
  %1225 = vmatprep.subr.bf16.mxu0 %v893
  %1226 = vmatpush1.bf16.msra.mxu0 %v892
  %1227 = vmatprep.subr.bf16.mxu0 %v953
  %1228 = vmatpush2.bf16.msra.mxu0 %v952
  %1229 = vmatprep.subr.bf16.mxu0 %v949
  %1230 = vmatpush2.bf16.msra.mxu0 %v948
  %1231 = vmatprep.subr.bf16.mxu0 %v945
  %1232 = vmatpush2.bf16.msra.mxu0 %v944
  %1233 = vmatprep.subr.bf16.mxu0 %v941
  %1234 = vmatpush2.bf16.msra.mxu0 %v940
  %1235 = vmatprep.subr.bf16.mxu0 %v937
  %1236 = vmatpush2.bf16.msra.mxu0 %v936
  %1237 = vmatprep.subr.bf16.mxu0 %v933
  %1238 = vmatpush2.bf16.msra.mxu0 %v932
  %1239 = vmatprep.subr.bf16.mxu0 %v929
  %1240 = vmatpush2.bf16.msra.mxu0 %v928
  %1241 = vmatprep.subr.bf16.mxu0 %v925
  %1242 = vmatpush2.bf16.msra.mxu0 %v924
  %1243 = vmatprep.mubr.bf16.mxu0 %v309
  %1244 = vmatmul.mubr.bf16.gmra.mxu0 %v308
  %v1245 = vpop.f32.mrf.mxu0
  %v1246 = vadd.f32 %v1203, %v1245
  %v1247 = vpop.f32.mrf.mxu0
  %v1248 = vadd.f32 %v1205, %v1247
  %v1249 = vpop.f32.mrf.mxu0
  %v1250 = vadd.f32 %v1207, %v1249
  %v1251 = vpop.f32.mrf.mxu0
  %v1252 = vadd.f32 %v1209, %v1251
  %1253 = vdwg.mxu0
  %s1254 = scalar_lea.vmem %s2, 1024
  %v1255 = vld [vmem:[%s1254] sm:$0xff]
  %v1256 = vld [vmem:[%s1254 + $0x8] sm:$0xff]
  %v1257 = vld [vmem:[%s1254 + $0x10] sm:$0xff]
  %v1258 = vld [vmem:[%s1254 + $0x18] sm:$0xff]
  %v1259 = vld [vmem:[%s1254 + $0x20] sm:$0xff]
  %v1260 = vld [vmem:[%s1254 + $0x28] sm:$0xff]
  %v1261 = vld [vmem:[%s1254 + $0x30] sm:$0xff]
  %v1262 = vld [vmem:[%s1254 + $0x38] sm:$0xff]
  %v1263 = vld [vmem:[%s1254 + $0x40] sm:$0xff]
  %v1264 = vld [vmem:[%s1254 + $0x48] sm:$0xff]
  %v1265 = vld [vmem:[%s1254 + $0x50] sm:$0xff]
  %v1266 = vld [vmem:[%s1254 + $0x58] sm:$0xff]
  %v1267 = vld [vmem:[%s1254 + $0x60] sm:$0xff]
  %v1268 = vld [vmem:[%s1254 + $0x68] sm:$0xff]
  %v1269 = vld [vmem:[%s1254 + $0x70] sm:$0xff]
  %v1270 = vld [vmem:[%s1254 + $0x78] sm:$0xff]
  %v1271 = vld [vmem:[%s1254 + $0x80] sm:$0xff]
  %v1272 = vld [vmem:[%s1254 + $0x88] sm:$0xff]
  %v1273 = vld [vmem:[%s1254 + $0x90] sm:$0xff]
  %v1274 = vld [vmem:[%s1254 + $0x98] sm:$0xff]
  %v1275 = vld [vmem:[%s1254 + $0xa0] sm:$0xff]
  %v1276 = vld [vmem:[%s1254 + $0xa8] sm:$0xff]
  %v1277 = vld [vmem:[%s1254 + $0xb0] sm:$0xff]
  %v1278 = vld [vmem:[%s1254 + $0xb8] sm:$0xff]
  %v1279 = vld [vmem:[%s1254 + $0xc0] sm:$0xff]
  %v1280 = vld [vmem:[%s1254 + $0xc8] sm:$0xff]
  %v1281 = vld [vmem:[%s1254 + $0xd0] sm:$0xff]
  %v1282 = vld [vmem:[%s1254 + $0xd8] sm:$0xff]
  %v1283 = vld [vmem:[%s1254 + $0xe0] sm:$0xff]
  %v1284 = vld [vmem:[%s1254 + $0xe8] sm:$0xff]
  %v1285 = vld [vmem:[%s1254 + $0xf0] sm:$0xff]
  %v1286 = vld [vmem:[%s1254 + $0xf8] sm:$0xff]
  %v1287 = vld [vmem:[%s1254 + $0x100] sm:$0xff]
  %v1288 = vld [vmem:[%s1254 + $0x108] sm:$0xff]
  %v1289 = vld [vmem:[%s1254 + $0x110] sm:$0xff]
  %v1290 = vld [vmem:[%s1254 + $0x118] sm:$0xff]
  %v1291 = vld [vmem:[%s1254 + $0x120] sm:$0xff]
  %v1292 = vld [vmem:[%s1254 + $0x128] sm:$0xff]
  %v1293 = vld [vmem:[%s1254 + $0x130] sm:$0xff]
  %v1294 = vld [vmem:[%s1254 + $0x138] sm:$0xff]
  %v1295 = vld [vmem:[%s1254 + $0x140] sm:$0xff]
  %v1296 = vld [vmem:[%s1254 + $0x148] sm:$0xff]
  %v1297 = vld [vmem:[%s1254 + $0x150] sm:$0xff]
  %v1298 = vld [vmem:[%s1254 + $0x158] sm:$0xff]
  %v1299 = vld [vmem:[%s1254 + $0x160] sm:$0xff]
  %v1300 = vld [vmem:[%s1254 + $0x168] sm:$0xff]
  %v1301 = vld [vmem:[%s1254 + $0x170] sm:$0xff]
  %v1302 = vld [vmem:[%s1254 + $0x178] sm:$0xff]
  %v1303 = vld [vmem:[%s1254 + $0x180] sm:$0xff]
  %v1304 = vld [vmem:[%s1254 + $0x188] sm:$0xff]
  %v1305 = vld [vmem:[%s1254 + $0x190] sm:$0xff]
  %v1306 = vld [vmem:[%s1254 + $0x198] sm:$0xff]
  %v1307 = vld [vmem:[%s1254 + $0x1a0] sm:$0xff]
  %v1308 = vld [vmem:[%s1254 + $0x1a8] sm:$0xff]
  %v1309 = vld [vmem:[%s1254 + $0x1b0] sm:$0xff]
  %v1310 = vld [vmem:[%s1254 + $0x1b8] sm:$0xff]
  %v1311 = vld [vmem:[%s1254 + $0x1c0] sm:$0xff]
  %v1312 = vld [vmem:[%s1254 + $0x1c8] sm:$0xff]
  %v1313 = vld [vmem:[%s1254 + $0x1d0] sm:$0xff]
  %v1314 = vld [vmem:[%s1254 + $0x1d8] sm:$0xff]
  %v1315 = vld [vmem:[%s1254 + $0x1e0] sm:$0xff]
  %v1316 = vld [vmem:[%s1254 + $0x1e8] sm:$0xff]
  %v1317 = vld [vmem:[%s1254 + $0x1f0] sm:$0xff]
  %v1318 = vld [vmem:[%s1254 + $0x1f8] sm:$0xff]
  %v1319 = vld [vmem:[%s1254 + $0x200] sm:$0xff]
  %v1320 = vld [vmem:[%s1254 + $0x208] sm:$0xff]
  %v1321 = vld [vmem:[%s1254 + $0x210] sm:$0xff]
  %v1322 = vld [vmem:[%s1254 + $0x218] sm:$0xff]
  %v1323 = vld [vmem:[%s1254 + $0x220] sm:$0xff]
  %v1324 = vld [vmem:[%s1254 + $0x228] sm:$0xff]
  %v1325 = vld [vmem:[%s1254 + $0x230] sm:$0xff]
  %v1326 = vld [vmem:[%s1254 + $0x238] sm:$0xff]
  %v1327 = vld [vmem:[%s1254 + $0x240] sm:$0xff]
  %v1328 = vld [vmem:[%s1254 + $0x248] sm:$0xff]
  %v1329 = vld [vmem:[%s1254 + $0x250] sm:$0xff]
  %v1330 = vld [vmem:[%s1254 + $0x258] sm:$0xff]
  %v1331 = vld [vmem:[%s1254 + $0x260] sm:$0xff]
  %v1332 = vld [vmem:[%s1254 + $0x268] sm:$0xff]
  %v1333 = vld [vmem:[%s1254 + $0x270] sm:$0xff]
  %v1334 = vld [vmem:[%s1254 + $0x278] sm:$0xff]
  %v1335 = vld [vmem:[%s1254 + $0x280] sm:$0xff]
  %v1336 = vld [vmem:[%s1254 + $0x288] sm:$0xff]
  %v1337 = vld [vmem:[%s1254 + $0x290] sm:$0xff]
  %v1338 = vld [vmem:[%s1254 + $0x298] sm:$0xff]
  %v1339 = vld [vmem:[%s1254 + $0x2a0] sm:$0xff]
  %v1340 = vld [vmem:[%s1254 + $0x2a8] sm:$0xff]
  %v1341 = vld [vmem:[%s1254 + $0x2b0] sm:$0xff]
  %v1342 = vld [vmem:[%s1254 + $0x2b8] sm:$0xff]
  %v1343 = vld [vmem:[%s1254 + $0x2c0] sm:$0xff]
  %v1344 = vld [vmem:[%s1254 + $0x2c8] sm:$0xff]
  %v1345 = vld [vmem:[%s1254 + $0x2d0] sm:$0xff]
  %v1346 = vld [vmem:[%s1254 + $0x2d8] sm:$0xff]
  %v1347 = vld [vmem:[%s1254 + $0x2e0] sm:$0xff]
  %v1348 = vld [vmem:[%s1254 + $0x2e8] sm:$0xff]
  %v1349 = vld [vmem:[%s1254 + $0x2f0] sm:$0xff]
  %v1350 = vld [vmem:[%s1254 + $0x2f8] sm:$0xff]
  %v1351 = vld [vmem:[%s1254 + $0x300] sm:$0xff]
  %v1352 = vld [vmem:[%s1254 + $0x308] sm:$0xff]
  %v1353 = vld [vmem:[%s1254 + $0x310] sm:$0xff]
  %v1354 = vld [vmem:[%s1254 + $0x318] sm:$0xff]
  %v1355 = vld [vmem:[%s1254 + $0x320] sm:$0xff]
  %v1356 = vld [vmem:[%s1254 + $0x328] sm:$0xff]
  %v1357 = vld [vmem:[%s1254 + $0x330] sm:$0xff]
  %v1358 = vld [vmem:[%s1254 + $0x338] sm:$0xff]
  %v1359 = vld [vmem:[%s1254 + $0x340] sm:$0xff]
  %v1360 = vld [vmem:[%s1254 + $0x348] sm:$0xff]
  %v1361 = vld [vmem:[%s1254 + $0x350] sm:$0xff]
  %v1362 = vld [vmem:[%s1254 + $0x358] sm:$0xff]
  %v1363 = vld [vmem:[%s1254 + $0x360] sm:$0xff]
  %v1364 = vld [vmem:[%s1254 + $0x368] sm:$0xff]
  %v1365 = vld [vmem:[%s1254 + $0x370] sm:$0xff]
  %v1366 = vld [vmem:[%s1254 + $0x378] sm:$0xff]
  %v1367 = vld [vmem:[%s1254 + $0x380] sm:$0xff]
  %v1368 = vld [vmem:[%s1254 + $0x388] sm:$0xff]
  %v1369 = vld [vmem:[%s1254 + $0x390] sm:$0xff]
  %v1370 = vld [vmem:[%s1254 + $0x398] sm:$0xff]
  %v1371 = vld [vmem:[%s1254 + $0x3a0] sm:$0xff]
  %v1372 = vld [vmem:[%s1254 + $0x3a8] sm:$0xff]
  %v1373 = vld [vmem:[%s1254 + $0x3b0] sm:$0xff]
  %v1374 = vld [vmem:[%s1254 + $0x3b8] sm:$0xff]
  %v1375 = vld [vmem:[%s1254 + $0x3c0] sm:$0xff]
  %v1376 = vld [vmem:[%s1254 + $0x3c8] sm:$0xff]
  %v1377 = vld [vmem:[%s1254 + $0x3d0] sm:$0xff]
  %v1378 = vld [vmem:[%s1254 + $0x3d8] sm:$0xff]
  %v1379 = vld [vmem:[%s1254 + $0x3e0] sm:$0xff]
  %v1380 = vld [vmem:[%s1254 + $0x3e8] sm:$0xff]
  %v1381 = vld [vmem:[%s1254 + $0x3f0] sm:$0xff]
  %v1382 = vld [vmem:[%s1254 + $0x3f8] sm:$0xff]
  %v1511 = vunpack.c.l.b16 %v1255
  %v1512 = vunpack.c.h.b16 %v1255
  %v1513 = vunpack.c.l.b16 %v1256
  %v1514 = vunpack.c.h.b16 %v1256
  %v1515 = vunpack.c.l.b16 %v1257
  %v1516 = vunpack.c.h.b16 %v1257
  %v1517 = vunpack.c.l.b16 %v1258
  %v1518 = vunpack.c.h.b16 %v1258
  %v1519 = vunpack.c.l.b16 %v1259
  %v1520 = vunpack.c.h.b16 %v1259
  %v1521 = vunpack.c.l.b16 %v1260
  %v1522 = vunpack.c.h.b16 %v1260
  %v1523 = vunpack.c.l.b16 %v1261
  %v1524 = vunpack.c.h.b16 %v1261
  %v1525 = vunpack.c.l.b16 %v1262
  %v1526 = vunpack.c.h.b16 %v1262
  %v1527 = vunpack.c.l.b16 %v1263
  %v1528 = vunpack.c.h.b16 %v1263
  %v1529 = vunpack.c.l.b16 %v1264
  %v1530 = vunpack.c.h.b16 %v1264
  %v1531 = vunpack.c.l.b16 %v1265
  %v1532 = vunpack.c.h.b16 %v1265
  %v1533 = vunpack.c.l.b16 %v1266
  %v1534 = vunpack.c.h.b16 %v1266
  %v1535 = vunpack.c.l.b16 %v1267
  %v1536 = vunpack.c.h.b16 %v1267
  %v1537 = vunpack.c.l.b16 %v1268
  %v1538 = vunpack.c.h.b16 %v1268
  %v1539 = vunpack.c.l.b16 %v1269
  %v1540 = vunpack.c.h.b16 %v1269
  %v1541 = vunpack.c.l.b16 %v1270
  %v1542 = vunpack.c.h.b16 %v1270
  %v1543 = vunpack.c.l.b16 %v1271
  %v1544 = vunpack.c.h.b16 %v1271
  %v1545 = vunpack.c.l.b16 %v1272
  %v1546 = vunpack.c.h.b16 %v1272
  %v1547 = vunpack.c.l.b16 %v1273
  %v1548 = vunpack.c.h.b16 %v1273
  %v1549 = vunpack.c.l.b16 %v1274
  %v1550 = vunpack.c.h.b16 %v1274
  %v1551 = vunpack.c.l.b16 %v1275
  %v1552 = vunpack.c.h.b16 %v1275
  %v1553 = vunpack.c.l.b16 %v1276
  %v1554 = vunpack.c.h.b16 %v1276
  %v1555 = vunpack.c.l.b16 %v1277
  %v1556 = vunpack.c.h.b16 %v1277
  %v1557 = vunpack.c.l.b16 %v1278
  %v1558 = vunpack.c.h.b16 %v1278
  %v1559 = vunpack.c.l.b16 %v1279
  %v1560 = vunpack.c.h.b16 %v1279
  %v1561 = vunpack.c.l.b16 %v1280
  %v1562 = vunpack.c.h.b16 %v1280
  %v1563 = vunpack.c.l.b16 %v1281
  %v1564 = vunpack.c.h.b16 %v1281
  %v1565 = vunpack.c.l.b16 %v1282
  %v1566 = vunpack.c.h.b16 %v1282
  %v1567 = vunpack.c.l.b16 %v1283
  %v1568 = vunpack.c.h.b16 %v1283
  %v1569 = vunpack.c.l.b16 %v1284
  %v1570 = vunpack.c.h.b16 %v1284
  %v1571 = vunpack.c.l.b16 %v1285
  %v1572 = vunpack.c.h.b16 %v1285
  %v1573 = vunpack.c.l.b16 %v1286
  %v1574 = vunpack.c.h.b16 %v1286
  %v1575 = vunpack.c.l.b16 %v1287
  %v1576 = vunpack.c.h.b16 %v1287
  %v1577 = vunpack.c.l.b16 %v1288
  %v1578 = vunpack.c.h.b16 %v1288
  %v1579 = vunpack.c.l.b16 %v1289
  %v1580 = vunpack.c.h.b16 %v1289
  %v1581 = vunpack.c.l.b16 %v1290
  %v1582 = vunpack.c.h.b16 %v1290
  %v1583 = vunpack.c.l.b16 %v1291
  %v1584 = vunpack.c.h.b16 %v1291
  %v1585 = vunpack.c.l.b16 %v1292
  %v1586 = vunpack.c.h.b16 %v1292
  %v1587 = vunpack.c.l.b16 %v1293
  %v1588 = vunpack.c.h.b16 %v1293
  %v1589 = vunpack.c.l.b16 %v1294
  %v1590 = vunpack.c.h.b16 %v1294
  %v1591 = vunpack.c.l.b16 %v1295
  %v1592 = vunpack.c.h.b16 %v1295
  %v1593 = vunpack.c.l.b16 %v1296
  %v1594 = vunpack.c.h.b16 %v1296
  %v1595 = vunpack.c.l.b16 %v1297
  %v1596 = vunpack.c.h.b16 %v1297
  %v1597 = vunpack.c.l.b16 %v1298
  %v1598 = vunpack.c.h.b16 %v1298
  %v1599 = vunpack.c.l.b16 %v1299
  %v1600 = vunpack.c.h.b16 %v1299
  %v1601 = vunpack.c.l.b16 %v1300
  %v1602 = vunpack.c.h.b16 %v1300
  %v1603 = vunpack.c.l.b16 %v1301
  %v1604 = vunpack.c.h.b16 %v1301
  %v1605 = vunpack.c.l.b16 %v1302
  %v1606 = vunpack.c.h.b16 %v1302
  %v1607 = vunpack.c.l.b16 %v1303
  %v1608 = vunpack.c.h.b16 %v1303
  %v1609 = vunpack.c.l.b16 %v1304
  %v1610 = vunpack.c.h.b16 %v1304
  %v1611 = vunpack.c.l.b16 %v1305
  %v1612 = vunpack.c.h.b16 %v1305
  %v1613 = vunpack.c.l.b16 %v1306
  %v1614 = vunpack.c.h.b16 %v1306
  %v1615 = vunpack.c.l.b16 %v1307
  %v1616 = vunpack.c.h.b16 %v1307
  %v1617 = vunpack.c.l.b16 %v1308
  %v1618 = vunpack.c.h.b16 %v1308
  %v1619 = vunpack.c.l.b16 %v1309
  %v1620 = vunpack.c.h.b16 %v1309
  %v1621 = vunpack.c.l.b16 %v1310
  %v1622 = vunpack.c.h.b16 %v1310
  %v1623 = vunpack.c.l.b16 %v1311
  %v1624 = vunpack.c.h.b16 %v1311
  %v1625 = vunpack.c.l.b16 %v1312
  %v1626 = vunpack.c.h.b16 %v1312
  %v1627 = vunpack.c.l.b16 %v1313
  %v1628 = vunpack.c.h.b16 %v1313
  %v1629 = vunpack.c.l.b16 %v1314
  %v1630 = vunpack.c.h.b16 %v1314
  %v1631 = vunpack.c.l.b16 %v1315
  %v1632 = vunpack.c.h.b16 %v1315
  %v1633 = vunpack.c.l.b16 %v1316
  %v1634 = vunpack.c.h.b16 %v1316
  %v1635 = vunpack.c.l.b16 %v1317
  %v1636 = vunpack.c.h.b16 %v1317
  %v1637 = vunpack.c.l.b16 %v1318
  %v1638 = vunpack.c.h.b16 %v1318
  %v1639 = vunpack.c.l.b16 %v1319
  %v1640 = vunpack.c.h.b16 %v1319
  %v1641 = vunpack.c.l.b16 %v1320
  %v1642 = vunpack.c.h.b16 %v1320
  %v1643 = vunpack.c.l.b16 %v1321
  %v1644 = vunpack.c.h.b16 %v1321
  %v1645 = vunpack.c.l.b16 %v1322
  %v1646 = vunpack.c.h.b16 %v1322
  %v1647 = vunpack.c.l.b16 %v1323
  %v1648 = vunpack.c.h.b16 %v1323
  %v1649 = vunpack.c.l.b16 %v1324
  %v1650 = vunpack.c.h.b16 %v1324
  %v1651 = vunpack.c.l.b16 %v1325
  %v1652 = vunpack.c.h.b16 %v1325
  %v1653 = vunpack.c.l.b16 %v1326
  %v1654 = vunpack.c.h.b16 %v1326
  %v1655 = vunpack.c.l.b16 %v1327
  %v1656 = vunpack.c.h.b16 %v1327
  %v1657 = vunpack.c.l.b16 %v1328
  %v1658 = vunpack.c.h.b16 %v1328
  %v1659 = vunpack.c.l.b16 %v1329
  %v1660 = vunpack.c.h.b16 %v1329
  %v1661 = vunpack.c.l.b16 %v1330
  %v1662 = vunpack.c.h.b16 %v1330
  %v1663 = vunpack.c.l.b16 %v1331
  %v1664 = vunpack.c.h.b16 %v1331
  %v1665 = vunpack.c.l.b16 %v1332
  %v1666 = vunpack.c.h.b16 %v1332
  %v1667 = vunpack.c.l.b16 %v1333
  %v1668 = vunpack.c.h.b16 %v1333
  %v1669 = vunpack.c.l.b16 %v1334
  %v1670 = vunpack.c.h.b16 %v1334
  %v1671 = vunpack.c.l.b16 %v1335
  %v1672 = vunpack.c.h.b16 %v1335
  %v1673 = vunpack.c.l.b16 %v1336
  %v1674 = vunpack.c.h.b16 %v1336
  %v1675 = vunpack.c.l.b16 %v1337
  %v1676 = vunpack.c.h.b16 %v1337
  %v1677 = vunpack.c.l.b16 %v1338
  %v1678 = vunpack.c.h.b16 %v1338
  %v1679 = vunpack.c.l.b16 %v1339
  %v1680 = vunpack.c.h.b16 %v1339
  %v1681 = vunpack.c.l.b16 %v1340
  %v1682 = vunpack.c.h.b16 %v1340
  %v1683 = vunpack.c.l.b16 %v1341
  %v1684 = vunpack.c.h.b16 %v1341
  %v1685 = vunpack.c.l.b16 %v1342
  %v1686 = vunpack.c.h.b16 %v1342
  %v1687 = vunpack.c.l.b16 %v1343
  %v1688 = vunpack.c.h.b16 %v1343
  %v1689 = vunpack.c.l.b16 %v1344
  %v1690 = vunpack.c.h.b16 %v1344
  %v1691 = vunpack.c.l.b16 %v1345
  %v1692 = vunpack.c.h.b16 %v1345
  %v1693 = vunpack.c.l.b16 %v1346
  %v1694 = vunpack.c.h.b16 %v1346
  %v1695 = vunpack.c.l.b16 %v1347
  %v1696 = vunpack.c.h.b16 %v1347
  %v1697 = vunpack.c.l.b16 %v1348
  %v1698 = vunpack.c.h.b16 %v1348
  %v1699 = vunpack.c.l.b16 %v1349
  %v1700 = vunpack.c.h.b16 %v1349
  %v1701 = vunpack.c.l.b16 %v1350
  %v1702 = vunpack.c.h.b16 %v1350
  %v1703 = vunpack.c.l.b16 %v1351
  %v1704 = vunpack.c.h.b16 %v1351
  %v1705 = vunpack.c.l.b16 %v1352
  %v1706 = vunpack.c.h.b16 %v1352
  %v1707 = vunpack.c.l.b16 %v1353
  %v1708 = vunpack.c.h.b16 %v1353
  %v1709 = vunpack.c.l.b16 %v1354
  %v1710 = vunpack.c.h.b16 %v1354
  %v1711 = vunpack.c.l.b16 %v1355
  %v1712 = vunpack.c.h.b16 %v1355
  %v1713 = vunpack.c.l.b16 %v1356
  %v1714 = vunpack.c.h.b16 %v1356
  %v1715 = vunpack.c.l.b16 %v1357
  %v1716 = vunpack.c.h.b16 %v1357
  %v1717 = vunpack.c.l.b16 %v1358
  %v1718 = vunpack.c.h.b16 %v1358
  %v1719 = vunpack.c.l.b16 %v1359
  %v1720 = vunpack.c.h.b16 %v1359
  %v1721 = vunpack.c.l.b16 %v1360
  %v1722 = vunpack.c.h.b16 %v1360
  %v1723 = vunpack.c.l.b16 %v1361
  %v1724 = vunpack.c.h.b16 %v1361
  %v1725 = vunpack.c.l.b16 %v1362
  %v1726 = vunpack.c.h.b16 %v1362
  %v1727 = vunpack.c.l.b16 %v1363
  %v1728 = vunpack.c.h.b16 %v1363
  %v1729 = vunpack.c.l.b16 %v1364
  %v1730 = vunpack.c.h.b16 %v1364
  %v1731 = vunpack.c.l.b16 %v1365
  %v1732 = vunpack.c.h.b16 %v1365
  %v1733 = vunpack.c.l.b16 %v1366
  %v1734 = vunpack.c.h.b16 %v1366
  %v1735 = vunpack.c.l.b16 %v1367
  %v1736 = vunpack.c.h.b16 %v1367
  %v1737 = vunpack.c.l.b16 %v1368
  %v1738 = vunpack.c.h.b16 %v1368
  %v1739 = vunpack.c.l.b16 %v1369
  %v1740 = vunpack.c.h.b16 %v1369
  %v1741 = vunpack.c.l.b16 %v1370
  %v1742 = vunpack.c.h.b16 %v1370
  %v1743 = vunpack.c.l.b16 %v1371
  %v1744 = vunpack.c.h.b16 %v1371
  %v1745 = vunpack.c.l.b16 %v1372
  %v1746 = vunpack.c.h.b16 %v1372
  %v1747 = vunpack.c.l.b16 %v1373
  %v1748 = vunpack.c.h.b16 %v1373
  %v1749 = vunpack.c.l.b16 %v1374
  %v1750 = vunpack.c.h.b16 %v1374
  %v1751 = vunpack.c.l.b16 %v1375
  %v1752 = vunpack.c.h.b16 %v1375
  %v1753 = vunpack.c.l.b16 %v1376
  %v1754 = vunpack.c.h.b16 %v1376
  %v1755 = vunpack.c.l.b16 %v1377
  %v1756 = vunpack.c.h.b16 %v1377
  %v1757 = vunpack.c.l.b16 %v1378
  %v1758 = vunpack.c.h.b16 %v1378
  %v1759 = vunpack.c.l.b16 %v1379
  %v1760 = vunpack.c.h.b16 %v1379
  %v1761 = vunpack.c.l.b16 %v1380
  %v1762 = vunpack.c.h.b16 %v1380
  %v1763 = vunpack.c.l.b16 %v1381
  %v1764 = vunpack.c.h.b16 %v1381
  %v1765 = vunpack.c.l.b16 %v1382
  %v1766 = vunpack.c.h.b16 %v1382
  %v1767 = vpack.c.b16 %v1515, %v1511
  %v1768 = vpack.c.b16 %v1516, %v1512
  %v1769 = vpack.c.b16 %v1517, %v1513
  %v1770 = vpack.c.b16 %v1518, %v1514
  %v1771 = vpack.c.b16 %v1523, %v1519
  %v1772 = vpack.c.b16 %v1524, %v1520
  %v1773 = vpack.c.b16 %v1525, %v1521
  %v1774 = vpack.c.b16 %v1526, %v1522
  %v1775 = vpack.c.b16 %v1531, %v1527
  %v1776 = vpack.c.b16 %v1532, %v1528
  %v1777 = vpack.c.b16 %v1533, %v1529
  %v1778 = vpack.c.b16 %v1534, %v1530
  %v1779 = vpack.c.b16 %v1539, %v1535
  %v1780 = vpack.c.b16 %v1540, %v1536
  %v1781 = vpack.c.b16 %v1541, %v1537
  %v1782 = vpack.c.b16 %v1542, %v1538
  %v1783 = vpack.c.b16 %v1547, %v1543
  %v1784 = vpack.c.b16 %v1548, %v1544
  %v1785 = vpack.c.b16 %v1549, %v1545
  %v1786 = vpack.c.b16 %v1550, %v1546
  %v1787 = vpack.c.b16 %v1555, %v1551
  %v1788 = vpack.c.b16 %v1556, %v1552
  %v1789 = vpack.c.b16 %v1557, %v1553
  %v1790 = vpack.c.b16 %v1558, %v1554
  %v1791 = vpack.c.b16 %v1563, %v1559
  %v1792 = vpack.c.b16 %v1564, %v1560
  %v1793 = vpack.c.b16 %v1565, %v1561
  %v1794 = vpack.c.b16 %v1566, %v1562
  %v1795 = vpack.c.b16 %v1571, %v1567
  %v1796 = vpack.c.b16 %v1572, %v1568
  %v1797 = vpack.c.b16 %v1573, %v1569
  %v1798 = vpack.c.b16 %v1574, %v1570
  %v1799 = vpack.c.b16 %v1579, %v1575
  %v1800 = vpack.c.b16 %v1580, %v1576
  %v1801 = vpack.c.b16 %v1581, %v1577
  %v1802 = vpack.c.b16 %v1582, %v1578
  %v1803 = vpack.c.b16 %v1587, %v1583
  %v1804 = vpack.c.b16 %v1588, %v1584
  %v1805 = vpack.c.b16 %v1589, %v1585
  %v1806 = vpack.c.b16 %v1590, %v1586
  %v1807 = vpack.c.b16 %v1595, %v1591
  %v1808 = vpack.c.b16 %v1596, %v1592
  %v1809 = vpack.c.b16 %v1597, %v1593
  %v1810 = vpack.c.b16 %v1598, %v1594
  %v1811 = vpack.c.b16 %v1603, %v1599
  %v1812 = vpack.c.b16 %v1604, %v1600
  %v1813 = vpack.c.b16 %v1605, %v1601
  %v1814 = vpack.c.b16 %v1606, %v1602
  %v1815 = vpack.c.b16 %v1611, %v1607
  %v1816 = vpack.c.b16 %v1612, %v1608
  %v1817 = vpack.c.b16 %v1613, %v1609
  %v1818 = vpack.c.b16 %v1614, %v1610
  %v1819 = vpack.c.b16 %v1619, %v1615
  %v1820 = vpack.c.b16 %v1620, %v1616
  %v1821 = vpack.c.b16 %v1621, %v1617
  %v1822 = vpack.c.b16 %v1622, %v1618
  %v1823 = vpack.c.b16 %v1627, %v1623
  %v1824 = vpack.c.b16 %v1628, %v1624
  %v1825 = vpack.c.b16 %v1629, %v1625
  %v1826 = vpack.c.b16 %v1630, %v1626
  %v1827 = vpack.c.b16 %v1635, %v1631
  %v1828 = vpack.c.b16 %v1636, %v1632
  %v1829 = vpack.c.b16 %v1637, %v1633
  %v1830 = vpack.c.b16 %v1638, %v1634
  %v1831 = vpack.c.b16 %v1643, %v1639
  %v1832 = vpack.c.b16 %v1644, %v1640
  %v1833 = vpack.c.b16 %v1645, %v1641
  %v1834 = vpack.c.b16 %v1646, %v1642
  %v1835 = vpack.c.b16 %v1651, %v1647
  %v1836 = vpack.c.b16 %v1652, %v1648
  %v1837 = vpack.c.b16 %v1653, %v1649
  %v1838 = vpack.c.b16 %v1654, %v1650
  %v1839 = vpack.c.b16 %v1659, %v1655
  %v1840 = vpack.c.b16 %v1660, %v1656
  %v1841 = vpack.c.b16 %v1661, %v1657
  %v1842 = vpack.c.b16 %v1662, %v1658
  %v1843 = vpack.c.b16 %v1667, %v1663
  %v1844 = vpack.c.b16 %v1668, %v1664
  %v1845 = vpack.c.b16 %v1669, %v1665
  %v1846 = vpack.c.b16 %v1670, %v1666
  %v1847 = vpack.c.b16 %v1675, %v1671
  %v1848 = vpack.c.b16 %v1676, %v1672
  %v1849 = vpack.c.b16 %v1677, %v1673
  %v1850 = vpack.c.b16 %v1678, %v1674
  %v1851 = vpack.c.b16 %v1683, %v1679
  %v1852 = vpack.c.b16 %v1684, %v1680
  %v1853 = vpack.c.b16 %v1685, %v1681
  %v1854 = vpack.c.b16 %v1686, %v1682
  %v1855 = vpack.c.b16 %v1691, %v1687
  %v1856 = vpack.c.b16 %v1692, %v1688
  %v1857 = vpack.c.b16 %v1693, %v1689
  %v1858 = vpack.c.b16 %v1694, %v1690
  %v1859 = vpack.c.b16 %v1699, %v1695
  %v1860 = vpack.c.b16 %v1700, %v1696
  %v1861 = vpack.c.b16 %v1701, %v1697
  %v1862 = vpack.c.b16 %v1702, %v1698
  %v1863 = vpack.c.b16 %v1707, %v1703
  %v1864 = vpack.c.b16 %v1708, %v1704
  %v1865 = vpack.c.b16 %v1709, %v1705
  %v1866 = vpack.c.b16 %v1710, %v1706
  %v1867 = vpack.c.b16 %v1715, %v1711
  %v1868 = vpack.c.b16 %v1716, %v1712
  %v1869 = vpack.c.b16 %v1717, %v1713
  %v1870 = vpack.c.b16 %v1718, %v1714
  %v1871 = vpack.c.b16 %v1723, %v1719
  %v1872 = vpack.c.b16 %v1724, %v1720
  %v1873 = vpack.c.b16 %v1725, %v1721
  %v1874 = vpack.c.b16 %v1726, %v1722
  %v1875 = vpack.c.b16 %v1731, %v1727
  %v1876 = vpack.c.b16 %v1732, %v1728
  %v1877 = vpack.c.b16 %v1733, %v1729
  %v1878 = vpack.c.b16 %v1734, %v1730
  %v1879 = vpack.c.b16 %v1739, %v1735
  %v1880 = vpack.c.b16 %v1740, %v1736
  %v1881 = vpack.c.b16 %v1741, %v1737
  %v1882 = vpack.c.b16 %v1742, %v1738
  %v1883 = vpack.c.b16 %v1747, %v1743
  %v1884 = vpack.c.b16 %v1748, %v1744
  %v1885 = vpack.c.b16 %v1749, %v1745
  %v1886 = vpack.c.b16 %v1750, %v1746
  %v1887 = vpack.c.b16 %v1755, %v1751
  %v1888 = vpack.c.b16 %v1756, %v1752
  %v1889 = vpack.c.b16 %v1757, %v1753
  %v1890 = vpack.c.b16 %v1758, %v1754
  %v1891 = vpack.c.b16 %v1763, %v1759
  %v1892 = vpack.c.b16 %v1764, %v1760
  %v1893 = vpack.c.b16 %v1765, %v1761
  %v1894 = vpack.c.b16 %v1766, %v1762
  %2023 = vmatprep.subr.bf16.mxu0 %v1796
  %2024 = vmatpush1.bf16.msra.mxu0 %v1795
  %2025 = vmatprep.subr.bf16.mxu0 %v1792
  %2026 = vmatpush1.bf16.msra.mxu0 %v1791
  %2027 = vmatprep.subr.bf16.mxu0 %v1788
  %2028 = vmatpush1.bf16.msra.mxu0 %v1787
  %2029 = vmatprep.subr.bf16.mxu0 %v1784
  %2030 = vmatpush1.bf16.msra.mxu0 %v1783
  %2031 = vmatprep.subr.bf16.mxu0 %v1780
  %2032 = vmatpush1.bf16.msra.mxu0 %v1779
  %2033 = vmatprep.subr.bf16.mxu0 %v1776
  %2034 = vmatpush1.bf16.msra.mxu0 %v1775
  %2035 = vmatprep.subr.bf16.mxu0 %v1772
  %2036 = vmatpush1.bf16.msra.mxu0 %v1771
  %2037 = vmatprep.subr.bf16.mxu0 %v1768
  %2038 = vmatpush1.bf16.msra.mxu0 %v1767
  %2039 = vmatprep.subr.bf16.mxu0 %v1828
  %2040 = vmatpush2.bf16.msra.mxu0 %v1827
  %2041 = vmatprep.subr.bf16.mxu0 %v1824
  %2042 = vmatpush2.bf16.msra.mxu0 %v1823
  %2043 = vmatprep.subr.bf16.mxu0 %v1820
  %2044 = vmatpush2.bf16.msra.mxu0 %v1819
  %2045 = vmatprep.subr.bf16.mxu0 %v1816
  %2046 = vmatpush2.bf16.msra.mxu0 %v1815
  %2047 = vmatprep.subr.bf16.mxu0 %v1812
  %2048 = vmatpush2.bf16.msra.mxu0 %v1811
  %2049 = vmatprep.subr.bf16.mxu0 %v1808
  %2050 = vmatpush2.bf16.msra.mxu0 %v1807
  %2051 = vmatprep.subr.bf16.mxu0 %v1804
  %2052 = vmatpush2.bf16.msra.mxu0 %v1803
  %2053 = vmatprep.subr.bf16.mxu0 %v1800
  %2054 = vmatpush2.bf16.msra.mxu0 %v1799
  %2055 = vmatprep.mubr.bf16.mxu0 %v311
  %2056 = vmatmul.mubr.bf16.gmra.mxu0 %v310
  %v2057 = vpop.f32.mrf.mxu0
  %v2058 = vadd.f32 0.0, %v2057
  %v2059 = vpop.f32.mrf.mxu0
  %v2060 = vadd.f32 0.0, %v2059
  %v2061 = vpop.f32.mrf.mxu0
  %v2062 = vadd.f32 0.0, %v2061
  %v2063 = vpop.f32.mrf.mxu0
  %v2064 = vadd.f32 0.0, %v2063
  %2065 = vdwg.mxu0
  %2066 = vmatprep.subr.bf16.mxu0 %v1860
  %2067 = vmatpush1.bf16.msra.mxu0 %v1859
  %2068 = vmatprep.subr.bf16.mxu0 %v1856
  %2069 = vmatpush1.bf16.msra.mxu0 %v1855
  %2070 = vmatprep.subr.bf16.mxu0 %v1852
  %2071 = vmatpush1.bf16.msra.mxu0 %v1851
  %2072 = vmatprep.subr.bf16.mxu0 %v1848
  %2073 = vmatpush1.bf16.msra.mxu0 %v1847
  %2074 = vmatprep.subr.bf16.mxu0 %v1844
  %2075 = vmatpush1.bf16.msra.mxu0 %v1843
  %2076 = vmatprep.subr.bf16.mxu0 %v1840
  %2077 = vmatpush1.bf16.msra.mxu0 %v1839
  %2078 = vmatprep.subr.bf16.mxu0 %v1836
  %2079 = vmatpush1.bf16.msra.mxu0 %v1835
  %2080 = vmatprep.subr.bf16.mxu0 %v1832
  %2081 = vmatpush1.bf16.msra.mxu0 %v1831
  %2082 = vmatprep.subr.bf16.mxu0 %v1892
  %2083 = vmatpush2.bf16.msra.mxu0 %v1891
  %2084 = vmatprep.subr.bf16.mxu0 %v1888
  %2085 = vmatpush2.bf16.msra.mxu0 %v1887
  %2086 = vmatprep.subr.bf16.mxu0 %v1884
  %2087 = vmatpush2.bf16.msra.mxu0 %v1883
  %2088 = vmatprep.subr.bf16.mxu0 %v1880
  %2089 = vmatpush2.bf16.msra.mxu0 %v1879
  %2090 = vmatprep.subr.bf16.mxu0 %v1876
  %2091 = vmatpush2.bf16.msra.mxu0 %v1875
  %2092 = vmatprep.subr.bf16.mxu0 %v1872
  %2093 = vmatpush2.bf16.msra.mxu0 %v1871
  %2094 = vmatprep.subr.bf16.mxu0 %v1868
  %2095 = vmatpush2.bf16.msra.mxu0 %v1867
  %2096 = vmatprep.subr.bf16.mxu0 %v1864
  %2097 = vmatpush2.bf16.msra.mxu0 %v1863
  %2098 = vmatprep.mubr.bf16.mxu0 %v313
  %2099 = vmatmul.mubr.bf16.gmra.mxu0 %v312
  %v2100 = vpop.f32.mrf.mxu0
  %v2101 = vadd.f32 %v2058, %v2100
  %v2102 = vpop.f32.mrf.mxu0
  %v2103 = vadd.f32 %v2060, %v2102
  %v2104 = vpop.f32.mrf.mxu0
  %v2105 = vadd.f32 %v2062, %v2104
  %v2106 = vpop.f32.mrf.mxu0
  %v2107 = vadd.f32 %v2064, %v2106
  %2108 = vdwg.mxu0
  %2109 = vmatprep.subr.bf16.mxu0 %v1798
  %2110 = vmatpush1.bf16.msra.mxu0 %v1797
  %2111 = vmatprep.subr.bf16.mxu0 %v1794
  %2112 = vmatpush1.bf16.msra.mxu0 %v1793
  %2113 = vmatprep.subr.bf16.mxu0 %v1790
  %2114 = vmatpush1.bf16.msra.mxu0 %v1789
  %2115 = vmatprep.subr.bf16.mxu0 %v1786
  %2116 = vmatpush1.bf16.msra.mxu0 %v1785
  %2117 = vmatprep.subr.bf16.mxu0 %v1782
  %2118 = vmatpush1.bf16.msra.mxu0 %v1781
  %2119 = vmatprep.subr.bf16.mxu0 %v1778
  %2120 = vmatpush1.bf16.msra.mxu0 %v1777
  %2121 = vmatprep.subr.bf16.mxu0 %v1774
  %2122 = vmatpush1.bf16.msra.mxu0 %v1773
  %2123 = vmatprep.subr.bf16.mxu0 %v1770
  %2124 = vmatpush1.bf16.msra.mxu0 %v1769
  %2125 = vmatprep.subr.bf16.mxu0 %v1830
  %2126 = vmatpush2.bf16.msra.mxu0 %v1829
  %2127 = vmatprep.subr.bf16.mxu0 %v1826
  %2128 = vmatpush2.bf16.msra.mxu0 %v1825
  %2129 = vmatprep.subr.bf16.mxu0 %v1822
  %2130 = vmatpush2.bf16.msra.mxu0 %v1821
  %2131 = vmatprep.subr.bf16.mxu0 %v1818
  %2132 = vmatpush2.bf16.msra.mxu0 %v1817
  %2133 = vmatprep.subr.bf16.mxu0 %v1814
  %2134 = vmatpush2.bf16.msra.mxu0 %v1813
  %2135 = vmatprep.subr.bf16.mxu0 %v1810
  %2136 = vmatpush2.bf16.msra.mxu0 %v1809
  %2137 = vmatprep.subr.bf16.mxu0 %v1806
  %2138 = vmatpush2.bf16.msra.mxu0 %v1805
  %2139 = vmatprep.subr.bf16.mxu0 %v1802
  %2140 = vmatpush2.bf16.msra.mxu0 %v1801
  %2141 = vmatprep.mubr.bf16.mxu0 %v311
  %2142 = vmatmul.mubr.bf16.gmra.mxu0 %v310
  %v2143 = vpop.f32.mrf.mxu0
  %v2144 = vadd.f32 0.0, %v2143
  %v2145 = vpop.f32.mrf.mxu0
  %v2146 = vadd.f32 0.0, %v2145
  %v2147 = vpop.f32.mrf.mxu0
  %v2148 = vadd.f32 0.0, %v2147
  %v2149 = vpop.f32.mrf.mxu0
  %v2150 = vadd.f32 0.0, %v2149
  %2151 = vdwg.mxu0
  %2152 = vmatprep.subr.bf16.mxu0 %v1862
  %2153 = vmatpush1.bf16.msra.mxu0 %v1861
  %2154 = vmatprep.subr.bf16.mxu0 %v1858
  %2155 = vmatpush1.bf16.msra.mxu0 %v1857
  %2156 = vmatprep.subr.bf16.mxu0 %v1854
  %2157 = vmatpush1.bf16.msra.mxu0 %v1853
  %2158 = vmatprep.subr.bf16.mxu0 %v1850
  %2159 = vmatpush1.bf16.msra.mxu0 %v1849
  %2160 = vmatprep.subr.bf16.mxu0 %v1846
  %2161 = vmatpush1.bf16.msra.mxu0 %v1845
  %2162 = vmatprep.subr.bf16.mxu0 %v1842
  %2163 = vmatpush1.bf16.msra.mxu0 %v1841
  %2164 = vmatprep.subr.bf16.mxu0 %v1838
  %2165 = vmatpush1.bf16.msra.mxu0 %v1837
  %2166 = vmatprep.subr.bf16.mxu0 %v1834
  %2167 = vmatpush1.bf16.msra.mxu0 %v1833
  %2168 = vmatprep.subr.bf16.mxu0 %v1894
  %2169 = vmatpush2.bf16.msra.mxu0 %v1893
  %2170 = vmatprep.subr.bf16.mxu0 %v1890
  %2171 = vmatpush2.bf16.msra.mxu0 %v1889
  %2172 = vmatprep.subr.bf16.mxu0 %v1886
  %2173 = vmatpush2.bf16.msra.mxu0 %v1885
  %2174 = vmatprep.subr.bf16.mxu0 %v1882
  %2175 = vmatpush2.bf16.msra.mxu0 %v1881
  %2176 = vmatprep.subr.bf16.mxu0 %v1878
  %2177 = vmatpush2.bf16.msra.mxu0 %v1877
  %2178 = vmatprep.subr.bf16.mxu0 %v1874
  %2179 = vmatpush2.bf16.msra.mxu0 %v1873
  %2180 = vmatprep.subr.bf16.mxu0 %v1870
  %2181 = vmatpush2.bf16.msra.mxu0 %v1869
  %2182 = vmatprep.subr.bf16.mxu0 %v1866
  %2183 = vmatpush2.bf16.msra.mxu0 %v1865
  %2184 = vmatprep.mubr.bf16.mxu0 %v313
  %2185 = vmatmul.mubr.bf16.gmra.mxu0 %v312
  %v2186 = vpop.f32.mrf.mxu0
  %v2187 = vadd.f32 %v2144, %v2186
  %v2188 = vpop.f32.mrf.mxu0
  %v2189 = vadd.f32 %v2146, %v2188
  %v2190 = vpop.f32.mrf.mxu0
  %v2191 = vadd.f32 %v2148, %v2190
  %v2192 = vpop.f32.mrf.mxu0
  %v2193 = vadd.f32 %v2150, %v2192
  %2194 = vdwg.mxu0
  %s2195 = scalar_lea.vmem %s4, 1
  %v2196 = vld [vmem:[%s2195] ss:$4 sm:$0xff]
  %v2198 = vlaneseq
  %v2199 = vshrl.u32 %v2198, 7
  %v2200 = vsub.s32 0, %v2199
  %v2201 = vrot.slane %v2196, %v2200
  %v2202 = vlaneseq
  %v2203 = vshrl.u32 %v2202, 7
  %v2204 = vsub.s32 1, %v2203
  %v2205 = vrot.slane %v2196, %v2204
  %v2206 = vlaneseq
  %v2207 = vshrl.u32 %v2206, 7
  %v2208 = vsub.s32 2, %v2207
  %v2209 = vrot.slane %v2196, %v2208
  %v2210 = vlaneseq
  %v2211 = vshrl.u32 %v2210, 7
  %v2212 = vsub.s32 3, %v2211
  %v2213 = vrot.slane %v2196, %v2212
  %v2214 = vlaneseq
  %v2215 = vshrl.u32 %v2214, 7
  %v2216 = vsub.s32 4, %v2215
  %v2217 = vrot.slane %v2196, %v2216
  %v2218 = vlaneseq
  %v2219 = vshrl.u32 %v2218, 7
  %v2220 = vsub.s32 5, %v2219
  %v2221 = vrot.slane %v2196, %v2220
  %v2222 = vlaneseq
  %v2223 = vshrl.u32 %v2222, 7
  %v2224 = vsub.s32 6, %v2223
  %v2225 = vrot.slane %v2196, %v2224
  %v2226 = vlaneseq
  %v2227 = vshrl.u32 %v2226, 7
  %v2228 = vsub.s32 7, %v2227
  %v2229 = vrot.slane %v2196, %v2228
  %v2238 = vadd.f32 %v1160, %v2201
  %v2239 = vadd.f32 %v1162, %v2205
  %v2240 = vadd.f32 %v1246, %v2209
  %v2241 = vadd.f32 %v1248, %v2213
  %v2242 = vadd.f32 %v2101, %v2217
  %v2243 = vadd.f32 %v2103, %v2221
  %v2244 = vadd.f32 %v2187, %v2225
  %v2245 = vadd.f32 %v2189, %v2229
  %v2246 = vadd.f32 %v1164, %v2201
  %v2247 = vadd.f32 %v1166, %v2205
  %v2248 = vadd.f32 %v1250, %v2209
  %v2249 = vadd.f32 %v1252, %v2213
  %v2250 = vadd.f32 %v2105, %v2217
  %v2251 = vadd.f32 %v2107, %v2221
  %v2252 = vadd.f32 %v2191, %v2225
  %v2253 = vadd.f32 %v2193, %v2229
  %v2254 = vmax.f32 %v2238, 0.0
  %v2255 = vmax.f32 %v2239, 0.0
  %v2256 = vmax.f32 %v2240, 0.0
  %v2257 = vmax.f32 %v2241, 0.0
  %v2258 = vmax.f32 %v2242, 0.0
  %v2259 = vmax.f32 %v2243, 0.0
  %v2260 = vmax.f32 %v2244, 0.0
  %v2261 = vmax.f32 %v2245, 0.0
  %v2262 = vmax.f32 %v2246, 0.0
  %v2263 = vmax.f32 %v2247, 0.0
  %v2264 = vmax.f32 %v2248, 0.0
  %v2265 = vmax.f32 %v2249, 0.0
  %v2266 = vmax.f32 %v2250, 0.0
  %v2267 = vmax.f32 %v2251, 0.0
  %v2268 = vmax.f32 %v2252, 0.0
  %v2269 = vmax.f32 %v2253, 0.0
  %v2270 = vpack.c.bf16 %v2262, %v2254
  %v2271 = vpack.c.bf16 %v2263, %v2255
  %v2272 = vpack.c.bf16 %v2264, %v2256
  %v2273 = vpack.c.bf16 %v2265, %v2257
  %v2274 = vpack.c.bf16 %v2266, %v2258
  %v2275 = vpack.c.bf16 %v2267, %v2259
  %v2276 = vpack.c.bf16 %v2268, %v2260
  %v2277 = vpack.c.bf16 %v2269, %v2261
  %v2278 = vld [vmem:[%s3] sm:$0xf]
  %v2279 = vld [vmem:[%s3 + $0x4] sm:$0xf]
  %v2280 = vld [vmem:[%s3 + $0x8] sm:$0xf]
  %v2281 = vld [vmem:[%s3 + $0xc] sm:$0xf]
  %v2282 = vld [vmem:[%s3 + $0x10] sm:$0xf]
  %v2283 = vld [vmem:[%s3 + $0x14] sm:$0xf]
  %v2284 = vld [vmem:[%s3 + $0x18] sm:$0xf]
  %v2285 = vld [vmem:[%s3 + $0x1c] sm:$0xf]
  %v2286 = vld [vmem:[%s3 + $0x20] sm:$0xf]
  %v2287 = vld [vmem:[%s3 + $0x24] sm:$0xf]
  %v2288 = vld [vmem:[%s3 + $0x28] sm:$0xf]
  %v2289 = vld [vmem:[%s3 + $0x2c] sm:$0xf]
  %v2290 = vld [vmem:[%s3 + $0x30] sm:$0xf]
  %v2291 = vld [vmem:[%s3 + $0x34] sm:$0xf]
  %v2292 = vld [vmem:[%s3 + $0x38] sm:$0xf]
  %v2293 = vld [vmem:[%s3 + $0x3c] sm:$0xf]
  %v2294 = vld [vmem:[%s3 + $0x40] sm:$0xf]
  %v2295 = vld [vmem:[%s3 + $0x44] sm:$0xf]
  %v2296 = vld [vmem:[%s3 + $0x48] sm:$0xf]
  %v2297 = vld [vmem:[%s3 + $0x4c] sm:$0xf]
  %v2298 = vld [vmem:[%s3 + $0x50] sm:$0xf]
  %v2299 = vld [vmem:[%s3 + $0x54] sm:$0xf]
  %v2300 = vld [vmem:[%s3 + $0x58] sm:$0xf]
  %v2301 = vld [vmem:[%s3 + $0x5c] sm:$0xf]
  %v2302 = vld [vmem:[%s3 + $0x60] sm:$0xf]
  %v2303 = vld [vmem:[%s3 + $0x64] sm:$0xf]
  %v2304 = vld [vmem:[%s3 + $0x68] sm:$0xf]
  %v2305 = vld [vmem:[%s3 + $0x6c] sm:$0xf]
  %v2306 = vld [vmem:[%s3 + $0x70] sm:$0xf]
  %v2307 = vld [vmem:[%s3 + $0x74] sm:$0xf]
  %v2308 = vld [vmem:[%s3 + $0x78] sm:$0xf]
  %v2309 = vld [vmem:[%s3 + $0x7c] sm:$0xf]
  %v2310 = vld [vmem:[%s3 + $0x80] sm:$0xf]
  %v2311 = vld [vmem:[%s3 + $0x84] sm:$0xf]
  %v2312 = vld [vmem:[%s3 + $0x88] sm:$0xf]
  %v2313 = vld [vmem:[%s3 + $0x8c] sm:$0xf]
  %v2314 = vld [vmem:[%s3 + $0x90] sm:$0xf]
  %v2315 = vld [vmem:[%s3 + $0x94] sm:$0xf]
  %v2316 = vld [vmem:[%s3 + $0x98] sm:$0xf]
  %v2317 = vld [vmem:[%s3 + $0x9c] sm:$0xf]
  %v2318 = vld [vmem:[%s3 + $0xa0] sm:$0xf]
  %v2319 = vld [vmem:[%s3 + $0xa4] sm:$0xf]
  %v2320 = vld [vmem:[%s3 + $0xa8] sm:$0xf]
  %v2321 = vld [vmem:[%s3 + $0xac] sm:$0xf]
  %v2322 = vld [vmem:[%s3 + $0xb0] sm:$0xf]
  %v2323 = vld [vmem:[%s3 + $0xb4] sm:$0xf]
  %v2324 = vld [vmem:[%s3 + $0xb8] sm:$0xf]
  %v2325 = vld [vmem:[%s3 + $0xbc] sm:$0xf]
  %v2326 = vld [vmem:[%s3 + $0xc0] sm:$0xf]
  %v2327 = vld [vmem:[%s3 + $0xc4] sm:$0xf]
  %v2328 = vld [vmem:[%s3 + $0xc8] sm:$0xf]
  %v2329 = vld [vmem:[%s3 + $0xcc] sm:$0xf]
  %v2330 = vld [vmem:[%s3 + $0xd0] sm:$0xf]
  %v2331 = vld [vmem:[%s3 + $0xd4] sm:$0xf]
  %v2332 = vld [vmem:[%s3 + $0xd8] sm:$0xf]
  %v2333 = vld [vmem:[%s3 + $0xdc] sm:$0xf]
  %v2334 = vld [vmem:[%s3 + $0xe0] sm:$0xf]
  %v2335 = vld [vmem:[%s3 + $0xe4] sm:$0xf]
  %v2336 = vld [vmem:[%s3 + $0xe8] sm:$0xf]
  %v2337 = vld [vmem:[%s3 + $0xec] sm:$0xf]
  %v2338 = vld [vmem:[%s3 + $0xf0] sm:$0xf]
  %v2339 = vld [vmem:[%s3 + $0xf4] sm:$0xf]
  %v2340 = vld [vmem:[%s3 + $0xf8] sm:$0xf]
  %v2341 = vld [vmem:[%s3 + $0xfc] sm:$0xf]
  %v2342 = vld [vmem:[%s3 + $0x100] sm:$0xf]
  %v2343 = vld [vmem:[%s3 + $0x104] sm:$0xf]
  %v2344 = vld [vmem:[%s3 + $0x108] sm:$0xf]
  %v2345 = vld [vmem:[%s3 + $0x10c] sm:$0xf]
  %v2346 = vld [vmem:[%s3 + $0x110] sm:$0xf]
  %v2347 = vld [vmem:[%s3 + $0x114] sm:$0xf]
  %v2348 = vld [vmem:[%s3 + $0x118] sm:$0xf]
  %v2349 = vld [vmem:[%s3 + $0x11c] sm:$0xf]
  %v2350 = vld [vmem:[%s3 + $0x120] sm:$0xf]
  %v2351 = vld [vmem:[%s3 + $0x124] sm:$0xf]
  %v2352 = vld [vmem:[%s3 + $0x128] sm:$0xf]
  %v2353 = vld [vmem:[%s3 + $0x12c] sm:$0xf]
  %v2354 = vld [vmem:[%s3 + $0x130] sm:$0xf]
  %v2355 = vld [vmem:[%s3 + $0x134] sm:$0xf]
  %v2356 = vld [vmem:[%s3 + $0x138] sm:$0xf]
  %v2357 = vld [vmem:[%s3 + $0x13c] sm:$0xf]
  %v2358 = vld [vmem:[%s3 + $0x140] sm:$0xf]
  %v2359 = vld [vmem:[%s3 + $0x144] sm:$0xf]
  %v2360 = vld [vmem:[%s3 + $0x148] sm:$0xf]
  %v2361 = vld [vmem:[%s3 + $0x14c] sm:$0xf]
  %v2362 = vld [vmem:[%s3 + $0x150] sm:$0xf]
  %v2363 = vld [vmem:[%s3 + $0x154] sm:$0xf]
  %v2364 = vld [vmem:[%s3 + $0x158] sm:$0xf]
  %v2365 = vld [vmem:[%s3 + $0x15c] sm:$0xf]
  %v2366 = vld [vmem:[%s3 + $0x160] sm:$0xf]
  %v2367 = vld [vmem:[%s3 + $0x164] sm:$0xf]
  %v2368 = vld [vmem:[%s3 + $0x168] sm:$0xf]
  %v2369 = vld [vmem:[%s3 + $0x16c] sm:$0xf]
  %v2370 = vld [vmem:[%s3 + $0x170] sm:$0xf]
  %v2371 = vld [vmem:[%s3 + $0x174] sm:$0xf]
  %v2372 = vld [vmem:[%s3 + $0x178] sm:$0xf]
  %v2373 = vld [vmem:[%s3 + $0x17c] sm:$0xf]
  %v2374 = vld [vmem:[%s3 + $0x180] sm:$0xf]
  %v2375 = vld [vmem:[%s3 + $0x184] sm:$0xf]
  %v2376 = vld [vmem:[%s3 + $0x188] sm:$0xf]
  %v2377 = vld [vmem:[%s3 + $0x18c] sm:$0xf]
  %v2378 = vld [vmem:[%s3 + $0x190] sm:$0xf]
  %v2379 = vld [vmem:[%s3 + $0x194] sm:$0xf]
  %v2380 = vld [vmem:[%s3 + $0x198] sm:$0xf]
  %v2381 = vld [vmem:[%s3 + $0x19c] sm:$0xf]
  %v2382 = vld [vmem:[%s3 + $0x1a0] sm:$0xf]
  %v2383 = vld [vmem:[%s3 + $0x1a4] sm:$0xf]
  %v2384 = vld [vmem:[%s3 + $0x1a8] sm:$0xf]
  %v2385 = vld [vmem:[%s3 + $0x1ac] sm:$0xf]
  %v2386 = vld [vmem:[%s3 + $0x1b0] sm:$0xf]
  %v2387 = vld [vmem:[%s3 + $0x1b4] sm:$0xf]
  %v2388 = vld [vmem:[%s3 + $0x1b8] sm:$0xf]
  %v2389 = vld [vmem:[%s3 + $0x1bc] sm:$0xf]
  %v2390 = vld [vmem:[%s3 + $0x1c0] sm:$0xf]
  %v2391 = vld [vmem:[%s3 + $0x1c4] sm:$0xf]
  %v2392 = vld [vmem:[%s3 + $0x1c8] sm:$0xf]
  %v2393 = vld [vmem:[%s3 + $0x1cc] sm:$0xf]
  %v2394 = vld [vmem:[%s3 + $0x1d0] sm:$0xf]
  %v2395 = vld [vmem:[%s3 + $0x1d4] sm:$0xf]
  %v2396 = vld [vmem:[%s3 + $0x1d8] sm:$0xf]
  %v2397 = vld [vmem:[%s3 + $0x1dc] sm:$0xf]
  %v2398 = vld [vmem:[%s3 + $0x1e0] sm:$0xf]
  %v2399 = vld [vmem:[%s3 + $0x1e4] sm:$0xf]
  %v2400 = vld [vmem:[%s3 + $0x1e8] sm:$0xf]
  %v2401 = vld [vmem:[%s3 + $0x1ec] sm:$0xf]
  %v2402 = vld [vmem:[%s3 + $0x1f0] sm:$0xf]
  %v2403 = vld [vmem:[%s3 + $0x1f4] sm:$0xf]
  %v2404 = vld [vmem:[%s3 + $0x1f8] sm:$0xf]
  %v2405 = vld [vmem:[%s3 + $0x1fc] sm:$0xf]
  %v2406 = vld [vmem:[%s4 + $0x2] sm:$0x1]
  %v2407 = vlaneseq
  %v2408 = vshrl.u32 %v2407, 7
  %v2409 = vsub.s32 0, %v2408
  %v2410 = vrot.slane %v2406, %v2409
  %v2539 = vunpack.c.l.b16 %v2278
  %v2540 = vunpack.c.l.b16 %v2279
  %v2541 = vunpack.c.l.b16 %v2280
  %v2542 = vunpack.c.l.b16 %v2281
  %v2543 = vunpack.c.l.b16 %v2282
  %v2544 = vunpack.c.l.b16 %v2283
  %v2545 = vunpack.c.l.b16 %v2284
  %v2546 = vunpack.c.l.b16 %v2285
  %v2547 = vunpack.c.l.b16 %v2286
  %v2548 = vunpack.c.l.b16 %v2287
  %v2549 = vunpack.c.l.b16 %v2288
  %v2550 = vunpack.c.l.b16 %v2289
  %v2551 = vunpack.c.l.b16 %v2290
  %v2552 = vunpack.c.l.b16 %v2291
  %v2553 = vunpack.c.l.b16 %v2292
  %v2554 = vunpack.c.l.b16 %v2293
  %v2555 = vunpack.c.l.b16 %v2294
  %v2556 = vunpack.c.l.b16 %v2295
  %v2557 = vunpack.c.l.b16 %v2296
  %v2558 = vunpack.c.l.b16 %v2297
  %v2559 = vunpack.c.l.b16 %v2298
  %v2560 = vunpack.c.l.b16 %v2299
  %v2561 = vunpack.c.l.b16 %v2300
  %v2562 = vunpack.c.l.b16 %v2301
  %v2563 = vunpack.c.l.b16 %v2302
  %v2564 = vunpack.c.l.b16 %v2303
  %v2565 = vunpack.c.l.b16 %v2304
  %v2566 = vunpack.c.l.b16 %v2305
  %v2567 = vunpack.c.l.b16 %v2306
  %v2568 = vunpack.c.l.b16 %v2307
  %v2569 = vunpack.c.l.b16 %v2308
  %v2570 = vunpack.c.l.b16 %v2309
  %v2571 = vunpack.c.l.b16 %v2310
  %v2572 = vunpack.c.l.b16 %v2311
  %v2573 = vunpack.c.l.b16 %v2312
  %v2574 = vunpack.c.l.b16 %v2313
  %v2575 = vunpack.c.l.b16 %v2314
  %v2576 = vunpack.c.l.b16 %v2315
  %v2577 = vunpack.c.l.b16 %v2316
  %v2578 = vunpack.c.l.b16 %v2317
  %v2579 = vunpack.c.l.b16 %v2318
  %v2580 = vunpack.c.l.b16 %v2319
  %v2581 = vunpack.c.l.b16 %v2320
  %v2582 = vunpack.c.l.b16 %v2321
  %v2583 = vunpack.c.l.b16 %v2322
  %v2584 = vunpack.c.l.b16 %v2323
  %v2585 = vunpack.c.l.b16 %v2324
  %v2586 = vunpack.c.l.b16 %v2325
  %v2587 = vunpack.c.l.b16 %v2326
  %v2588 = vunpack.c.l.b16 %v2327
  %v2589 = vunpack.c.l.b16 %v2328
  %v2590 = vunpack.c.l.b16 %v2329
  %v2591 = vunpack.c.l.b16 %v2330
  %v2592 = vunpack.c.l.b16 %v2331
  %v2593 = vunpack.c.l.b16 %v2332
  %v2594 = vunpack.c.l.b16 %v2333
  %v2595 = vunpack.c.l.b16 %v2334
  %v2596 = vunpack.c.l.b16 %v2335
  %v2597 = vunpack.c.l.b16 %v2336
  %v2598 = vunpack.c.l.b16 %v2337
  %v2599 = vunpack.c.l.b16 %v2338
  %v2600 = vunpack.c.l.b16 %v2339
  %v2601 = vunpack.c.l.b16 %v2340
  %v2602 = vunpack.c.l.b16 %v2341
  %v2603 = vunpack.c.l.b16 %v2342
  %v2604 = vunpack.c.l.b16 %v2343
  %v2605 = vunpack.c.l.b16 %v2344
  %v2606 = vunpack.c.l.b16 %v2345
  %v2607 = vunpack.c.l.b16 %v2346
  %v2608 = vunpack.c.l.b16 %v2347
  %v2609 = vunpack.c.l.b16 %v2348
  %v2610 = vunpack.c.l.b16 %v2349
  %v2611 = vunpack.c.l.b16 %v2350
  %v2612 = vunpack.c.l.b16 %v2351
  %v2613 = vunpack.c.l.b16 %v2352
  %v2614 = vunpack.c.l.b16 %v2353
  %v2615 = vunpack.c.l.b16 %v2354
  %v2616 = vunpack.c.l.b16 %v2355
  %v2617 = vunpack.c.l.b16 %v2356
  %v2618 = vunpack.c.l.b16 %v2357
  %v2619 = vunpack.c.l.b16 %v2358
  %v2620 = vunpack.c.l.b16 %v2359
  %v2621 = vunpack.c.l.b16 %v2360
  %v2622 = vunpack.c.l.b16 %v2361
  %v2623 = vunpack.c.l.b16 %v2362
  %v2624 = vunpack.c.l.b16 %v2363
  %v2625 = vunpack.c.l.b16 %v2364
  %v2626 = vunpack.c.l.b16 %v2365
  %v2627 = vunpack.c.l.b16 %v2366
  %v2628 = vunpack.c.l.b16 %v2367
  %v2629 = vunpack.c.l.b16 %v2368
  %v2630 = vunpack.c.l.b16 %v2369
  %v2631 = vunpack.c.l.b16 %v2370
  %v2632 = vunpack.c.l.b16 %v2371
  %v2633 = vunpack.c.l.b16 %v2372
  %v2634 = vunpack.c.l.b16 %v2373
  %v2635 = vunpack.c.l.b16 %v2374
  %v2636 = vunpack.c.l.b16 %v2375
  %v2637 = vunpack.c.l.b16 %v2376
  %v2638 = vunpack.c.l.b16 %v2377
  %v2639 = vunpack.c.l.b16 %v2378
  %v2640 = vunpack.c.l.b16 %v2379
  %v2641 = vunpack.c.l.b16 %v2380
  %v2642 = vunpack.c.l.b16 %v2381
  %v2643 = vunpack.c.l.b16 %v2382
  %v2644 = vunpack.c.l.b16 %v2383
  %v2645 = vunpack.c.l.b16 %v2384
  %v2646 = vunpack.c.l.b16 %v2385
  %v2647 = vunpack.c.l.b16 %v2386
  %v2648 = vunpack.c.l.b16 %v2387
  %v2649 = vunpack.c.l.b16 %v2388
  %v2650 = vunpack.c.l.b16 %v2389
  %v2651 = vunpack.c.l.b16 %v2390
  %v2652 = vunpack.c.l.b16 %v2391
  %v2653 = vunpack.c.l.b16 %v2392
  %v2654 = vunpack.c.l.b16 %v2393
  %v2655 = vunpack.c.l.b16 %v2394
  %v2656 = vunpack.c.l.b16 %v2395
  %v2657 = vunpack.c.l.b16 %v2396
  %v2658 = vunpack.c.l.b16 %v2397
  %v2659 = vunpack.c.l.b16 %v2398
  %v2660 = vunpack.c.l.b16 %v2399
  %v2661 = vunpack.c.l.b16 %v2400
  %v2662 = vunpack.c.l.b16 %v2401
  %v2663 = vunpack.c.l.b16 %v2402
  %v2664 = vunpack.c.l.b16 %v2403
  %v2665 = vunpack.c.l.b16 %v2404
  %v2666 = vunpack.c.l.b16 %v2405
  %v2667 = vpack.c.b16 %v2540, %v2539
  %v2668 = vpack.c.b16 %v2542, %v2541
  %v2669 = vpack.c.b16 %v2544, %v2543
  %v2670 = vpack.c.b16 %v2546, %v2545
  %v2671 = vpack.c.b16 %v2548, %v2547
  %v2672 = vpack.c.b16 %v2550, %v2549
  %v2673 = vpack.c.b16 %v2552, %v2551
  %v2674 = vpack.c.b16 %v2554, %v2553
  %v2675 = vpack.c.b16 %v2556, %v2555
  %v2676 = vpack.c.b16 %v2558, %v2557
  %v2677 = vpack.c.b16 %v2560, %v2559
  %v2678 = vpack.c.b16 %v2562, %v2561
  %v2679 = vpack.c.b16 %v2564, %v2563
  %v2680 = vpack.c.b16 %v2566, %v2565
  %v2681 = vpack.c.b16 %v2568, %v2567
  %v2682 = vpack.c.b16 %v2570, %v2569
  %v2683 = vpack.c.b16 %v2572, %v2571
  %v2684 = vpack.c.b16 %v2574, %v2573
  %v2685 = vpack.c.b16 %v2576, %v2575
  %v2686 = vpack.c.b16 %v2578, %v2577
  %v2687 = vpack.c.b16 %v2580, %v2579
  %v2688 = vpack.c.b16 %v2582, %v2581
  %v2689 = vpack.c.b16 %v2584, %v2583
  %v2690 = vpack.c.b16 %v2586, %v2585
  %v2691 = vpack.c.b16 %v2588, %v2587
  %v2692 = vpack.c.b16 %v2590, %v2589
  %v2693 = vpack.c.b16 %v2592, %v2591
  %v2694 = vpack.c.b16 %v2594, %v2593
  %v2695 = vpack.c.b16 %v2596, %v2595
  %v2696 = vpack.c.b16 %v2598, %v2597
  %v2697 = vpack.c.b16 %v2600, %v2599
  %v2698 = vpack.c.b16 %v2602, %v2601
  %v2699 = vpack.c.b16 %v2604, %v2603
  %v2700 = vpack.c.b16 %v2606, %v2605
  %v2701 = vpack.c.b16 %v2608, %v2607
  %v2702 = vpack.c.b16 %v2610, %v2609
  %v2703 = vpack.c.b16 %v2612, %v2611
  %v2704 = vpack.c.b16 %v2614, %v2613
  %v2705 = vpack.c.b16 %v2616, %v2615
  %v2706 = vpack.c.b16 %v2618, %v2617
  %v2707 = vpack.c.b16 %v2620, %v2619
  %v2708 = vpack.c.b16 %v2622, %v2621
  %v2709 = vpack.c.b16 %v2624, %v2623
  %v2710 = vpack.c.b16 %v2626, %v2625
  %v2711 = vpack.c.b16 %v2628, %v2627
  %v2712 = vpack.c.b16 %v2630, %v2629
  %v2713 = vpack.c.b16 %v2632, %v2631
  %v2714 = vpack.c.b16 %v2634, %v2633
  %v2715 = vpack.c.b16 %v2636, %v2635
  %v2716 = vpack.c.b16 %v2638, %v2637
  %v2717 = vpack.c.b16 %v2640, %v2639
  %v2718 = vpack.c.b16 %v2642, %v2641
  %v2719 = vpack.c.b16 %v2644, %v2643
  %v2720 = vpack.c.b16 %v2646, %v2645
  %v2721 = vpack.c.b16 %v2648, %v2647
  %v2722 = vpack.c.b16 %v2650, %v2649
  %v2723 = vpack.c.b16 %v2652, %v2651
  %v2724 = vpack.c.b16 %v2654, %v2653
  %v2725 = vpack.c.b16 %v2656, %v2655
  %v2726 = vpack.c.b16 %v2658, %v2657
  %v2727 = vpack.c.b16 %v2660, %v2659
  %v2728 = vpack.c.b16 %v2662, %v2661
  %v2729 = vpack.c.b16 %v2664, %v2663
  %v2730 = vpack.c.b16 %v2666, %v2665
  %2795 = vmatprep.subr.bf16.mxu0 0
  %2796 = vmatpush1.bf16.msra.mxu0 %v2674
  %2797 = vmatprep.subr.bf16.mxu0 0
  %2798 = vmatpush1.bf16.msra.mxu0 %v2673
  %2799 = vmatprep.subr.bf16.mxu0 0
  %2800 = vmatpush1.bf16.msra.mxu0 %v2672
  %2801 = vmatprep.subr.bf16.mxu0 0
  %2802 = vmatpush1.bf16.msra.mxu0 %v2671
  %2803 = vmatprep.subr.bf16.mxu0 0
  %2804 = vmatpush1.bf16.msra.mxu0 %v2670
  %2805 = vmatprep.subr.bf16.mxu0 0
  %2806 = vmatpush1.bf16.msra.mxu0 %v2669
  %2807 = vmatprep.subr.bf16.mxu0 0
  %2808 = vmatpush1.bf16.msra.mxu0 %v2668
  %2809 = vmatprep.subr.bf16.mxu0 0
  %2810 = vmatpush1.bf16.msra.mxu0 %v2667
  %2811 = vmatprep.subr.bf16.mxu0 0
  %2812 = vmatpush2.bf16.msra.mxu0 %v2682
  %2813 = vmatprep.subr.bf16.mxu0 0
  %2814 = vmatpush2.bf16.msra.mxu0 %v2681
  %2815 = vmatprep.subr.bf16.mxu0 0
  %2816 = vmatpush2.bf16.msra.mxu0 %v2680
  %2817 = vmatprep.subr.bf16.mxu0 0
  %2818 = vmatpush2.bf16.msra.mxu0 %v2679
  %2819 = vmatprep.subr.bf16.mxu0 0
  %2820 = vmatpush2.bf16.msra.mxu0 %v2678
  %2821 = vmatprep.subr.bf16.mxu0 0
  %2822 = vmatpush2.bf16.msra.mxu0 %v2677
  %2823 = vmatprep.subr.bf16.mxu0 0
  %2824 = vmatpush2.bf16.msra.mxu0 %v2676
  %2825 = vmatprep.subr.bf16.mxu0 0
  %2826 = vmatpush2.bf16.msra.mxu0 %v2675
  %2827 = vmatprep.mubr.bf16.mxu0 %v2271
  %2828 = vmatmul.mubr.bf16.gmra.mxu0 %v2270
  %v2829 = vpop.f32.mrf.mxu0
  %v2830 = vadd.f32 %v2410, %v2829
  %v2831 = vpop.f32.mrf.mxu0
  %v2832 = vpop.f32.mrf.mxu0
  %v2833 = vadd.f32 %v2410, %v2832
  %v2834 = vpop.f32.mrf.mxu0
  %2835 = vdwg.mxu0
  %2836 = vmatprep.subr.bf16.mxu0 0
  %2837 = vmatpush1.bf16.msra.mxu0 %v2690
  %2838 = vmatprep.subr.bf16.mxu0 0
  %2839 = vmatpush1.bf16.msra.mxu0 %v2689
  %2840 = vmatprep.subr.bf16.mxu0 0
  %2841 = vmatpush1.bf16.msra.mxu0 %v2688
  %2842 = vmatprep.subr.bf16.mxu0 0
  %2843 = vmatpush1.bf16.msra.mxu0 %v2687
  %2844 = vmatprep.subr.bf16.mxu0 0
  %2845 = vmatpush1.bf16.msra.mxu0 %v2686
  %2846 = vmatprep.subr.bf16.mxu0 0
  %2847 = vmatpush1.bf16.msra.mxu0 %v2685
  %2848 = vmatprep.subr.bf16.mxu0 0
  %2849 = vmatpush1.bf16.msra.mxu0 %v2684
  %2850 = vmatprep.subr.bf16.mxu0 0
  %2851 = vmatpush1.bf16.msra.mxu0 %v2683
  %2852 = vmatprep.subr.bf16.mxu0 0
  %2853 = vmatpush2.bf16.msra.mxu0 %v2698
  %2854 = vmatprep.subr.bf16.mxu0 0
  %2855 = vmatpush2.bf16.msra.mxu0 %v2697
  %2856 = vmatprep.subr.bf16.mxu0 0
  %2857 = vmatpush2.bf16.msra.mxu0 %v2696
  %2858 = vmatprep.subr.bf16.mxu0 0
  %2859 = vmatpush2.bf16.msra.mxu0 %v2695
  %2860 = vmatprep.subr.bf16.mxu0 0
  %2861 = vmatpush2.bf16.msra.mxu0 %v2694
  %2862 = vmatprep.subr.bf16.mxu0 0
  %2863 = vmatpush2.bf16.msra.mxu0 %v2693
  %2864 = vmatprep.subr.bf16.mxu0 0
  %2865 = vmatpush2.bf16.msra.mxu0 %v2692
  %2866 = vmatprep.subr.bf16.mxu0 0
  %2867 = vmatpush2.bf16.msra.mxu0 %v2691
  %2868 = vmatprep.mubr.bf16.mxu0 %v2273
  %2869 = vmatmul.mubr.bf16.gmra.mxu0 %v2272
  %v2870 = vpop.f32.mrf.mxu0
  %v2871 = vadd.f32 %v2830, %v2870
  %v2872 = vpop.f32.mrf.mxu0
  %v2873 = vpop.f32.mrf.mxu0
  %v2874 = vadd.f32 %v2833, %v2873
  %v2875 = vpop.f32.mrf.mxu0
  %2876 = vdwg.mxu0
  %2877 = vmatprep.subr.bf16.mxu0 0
  %2878 = vmatpush1.bf16.msra.mxu0 %v2706
  %2879 = vmatprep.subr.bf16.mxu0 0
  %2880 = vmatpush1.bf16.msra.mxu0 %v2705
  %2881 = vmatprep.subr.bf16.mxu0 0
  %2882 = vmatpush1.bf16.msra.mxu0 %v2704
  %2883 = vmatprep.subr.bf16.mxu0 0
  %2884 = vmatpush1.bf16.msra.mxu0 %v2703
  %2885 = vmatprep.subr.bf16.mxu0 0
  %2886 = vmatpush1.bf16.msra.mxu0 %v2702
  %2887 = vmatprep.subr.bf16.mxu0 0
  %2888 = vmatpush1.bf16.msra.mxu0 %v2701
  %2889 = vmatprep.subr.bf16.mxu0 0
  %2890 = vmatpush1.bf16.msra.mxu0 %v2700
  %2891 = vmatprep.subr.bf16.mxu0 0
  %2892 = vmatpush1.bf16.msra.mxu0 %v2699
  %2893 = vmatprep.subr.bf16.mxu0 0
  %2894 = vmatpush2.bf16.msra.mxu0 %v2714
  %2895 = vmatprep.subr.bf16.mxu0 0
  %2896 = vmatpush2.bf16.msra.mxu0 %v2713
  %2897 = vmatprep.subr.bf16.mxu0 0
  %2898 = vmatpush2.bf16.msra.mxu0 %v2712
  %2899 = vmatprep.subr.bf16.mxu0 0
  %2900 = vmatpush2.bf16.msra.mxu0 %v2711
  %2901 = vmatprep.subr.bf16.mxu0 0
  %2902 = vmatpush2.bf16.msra.mxu0 %v2710
  %2903 = vmatprep.subr.bf16.mxu0 0
  %2904 = vmatpush2.bf16.msra.mxu0 %v2709
  %2905 = vmatprep.subr.bf16.mxu0 0
  %2906 = vmatpush2.bf16.msra.mxu0 %v2708
  %2907 = vmatprep.subr.bf16.mxu0 0
  %2908 = vmatpush2.bf16.msra.mxu0 %v2707
  %2909 = vmatprep.mubr.bf16.mxu0 %v2275
  %2910 = vmatmul.mubr.bf16.gmra.mxu0 %v2274
  %v2911 = vpop.f32.mrf.mxu0
  %v2912 = vadd.f32 %v2871, %v2911
  %v2913 = vpop.f32.mrf.mxu0
  %v2914 = vpop.f32.mrf.mxu0
  %v2915 = vadd.f32 %v2874, %v2914
  %v2916 = vpop.f32.mrf.mxu0
  %2917 = vdwg.mxu0
  %2918 = vmatprep.subr.bf16.mxu0 0
  %2919 = vmatpush1.bf16.msra.mxu0 %v2722
  %2920 = vmatprep.subr.bf16.mxu0 0
  %2921 = vmatpush1.bf16.msra.mxu0 %v2721
  %2922 = vmatprep.subr.bf16.mxu0 0
  %2923 = vmatpush1.bf16.msra.mxu0 %v2720
  %2924 = vmatprep.subr.bf16.mxu0 0
  %2925 = vmatpush1.bf16.msra.mxu0 %v2719
  %2926 = vmatprep.subr.bf16.mxu0 0
  %2927 = vmatpush1.bf16.msra.mxu0 %v2718
  %2928 = vmatprep.subr.bf16.mxu0 0
  %2929 = vmatpush1.bf16.msra.mxu0 %v2717
  %2930 = vmatprep.subr.bf16.mxu0 0
  %2931 = vmatpush1.bf16.msra.mxu0 %v2716
  %2932 = vmatprep.subr.bf16.mxu0 0
  %2933 = vmatpush1.bf16.msra.mxu0 %v2715
  %2934 = vmatprep.subr.bf16.mxu0 0
  %2935 = vmatpush2.bf16.msra.mxu0 %v2730
  %2936 = vmatprep.subr.bf16.mxu0 0
  %2937 = vmatpush2.bf16.msra.mxu0 %v2729
  %2938 = vmatprep.subr.bf16.mxu0 0
  %2939 = vmatpush2.bf16.msra.mxu0 %v2728
  %2940 = vmatprep.subr.bf16.mxu0 0
  %2941 = vmatpush2.bf16.msra.mxu0 %v2727
  %2942 = vmatprep.subr.bf16.mxu0 0
  %2943 = vmatpush2.bf16.msra.mxu0 %v2726
  %2944 = vmatprep.subr.bf16.mxu0 0
  %2945 = vmatpush2.bf16.msra.mxu0 %v2725
  %2946 = vmatprep.subr.bf16.mxu0 0
  %2947 = vmatpush2.bf16.msra.mxu0 %v2724
  %2948 = vmatprep.subr.bf16.mxu0 0
  %2949 = vmatpush2.bf16.msra.mxu0 %v2723
  %2950 = vmatprep.mubr.bf16.mxu0 %v2277
  %2951 = vmatmul.mubr.bf16.gmra.mxu0 %v2276
  %v2952 = vpop.f32.mrf.mxu0
  %v2953 = vadd.f32 %v2912, %v2952
  %v2954 = vpop.f32.mrf.mxu0
  %v2955 = vpop.f32.mrf.mxu0
  %v2956 = vadd.f32 %v2915, %v2955
  %v2957 = vpop.f32.mrf.mxu0
  %2958 = vdwg.mxu0
  %v2959 = vsel %vm114, %v2953, 0.0
  %v2960 = vsel %vm114, %v2956, 0.0
  %2961 = vst [vmem:[%s5] sm:$0xff] %v2959
  %2962 = vst [vmem:[%s5 + $0x8] sm:$0xff] %v2960
  // Predicated region
  $region22: #{default_critic_forward.1} parent=0 // pred_check
    _
  $region23: #{default_critic_forward.1} parent=0 // pred_check_branch
    %2964 = sbr.rel (0) target = $region25
  $region24: #{default_critic_forward.1} parent=0 // pred_region
    _
  $region25: #{default_critic_forward.1} parent=0 // pred_fallthru
    _
  // Predicated region
  $region26: #{default_critic_forward.1} parent=0 // pred_check
    _
  $region27: #{default_critic_forward.1} parent=0 // pred_check_branch
    %2966 = sbr.rel (0) target = $region29
  $region28: #{default_critic_forward.1} parent=0 // pred_region
    _
  $region29: #{default_critic_forward.1} parent=0 // pred_fallthru
    _

</llo_original>
